<compile_context>
chip_gen: v7x
topology: tpu7x:2x2x1
jax: 0.10.0
libtpu: 0.0.40
codegen_flags: <defaults>
</compile_context>

<pallas_src>
import functools

import jax
import jax.numpy as jnp
from jax.experimental import pallas as pl
from jax.experimental.pallas import tpu as pltpu


def _encoder_kernel(x_ref, w1_ref, b1_ref, w2_ref, b2_ref, xo_ref, po_ref,
                    *, H, W, Cout):
    # x_ref : (1, H+2, W*Cin)    bf16, row-padded, lane-dense input (one image)
    # w1_ref: (3, W*Cin,  W*Cout) bf16 block-banded conv1 weights (one per dy)
    # b1_ref: (1, W*Cout)        f32  lane-dense bias
    # w2_ref: (3, W*Cout, W*Cout) bf16 block-banded conv2 weights
    # b2_ref: (1, W*Cout)        f32
    # xo_ref: (1, H, W*Cout)     f32  ConvBlock output (lane-dense)
    # po_ref: (1, H//2, (W//2)*Cout) f32 pooled output (lane-dense)
    WC = W * Cout
    xp = x_ref[0]                                     # (H+2, W*Cin) bf16

    # ---- conv1: 3 row-shifted band matmuls, bias-initialized f32 accumulator ----
    acc1 = jnp.broadcast_to(b1_ref[...], (H, WC))
    for dy in range(3):
        acc1 = acc1 + jnp.dot(xp[dy:dy + H, :], w1_ref[dy],
                              preferred_element_type=jnp.float32)
    y1 = jnp.maximum(acc1, 0.0)                       # (H, W*Cout) f32

    # ---- conv2: keep intermediate in registers; only a 2-row zero halo ----
    zrow = jnp.zeros((1, WC), jnp.float32)
    y1p = jnp.concatenate([zrow, y1, zrow], axis=0).astype(jnp.bfloat16)
    acc2 = jnp.broadcast_to(b2_ref[...], (H, WC))
    for dy in range(3):
        acc2 = acc2 + jnp.dot(y1p[dy:dy + H, :], w2_ref[dy],
                              preferred_element_type=jnp.float32)
    y2 = jnp.maximum(acc2, 0.0)                       # (H, W*Cout) f32

    xo_ref[0] = y2.astype(xo_ref.dtype)               # full 128-lane store

    # ---- MaxPool2d((2, 2)) in the lane-dense layout ----
    # Row pairs: reduce over the (sublane) pair axis.
    rp = jnp.max(y2.reshape(H // 2, 2, WC), axis=1)                  # (H//2, WC)
    # Column pairs: split the lane dim into (W//2, 2*Cout) and max the halves.
    r3 = rp.reshape(H // 2, W // 2, 2 * Cout)
    cp = jnp.maximum(r3[:, :, :Cout], r3[:, :, Cout:])               # (H//2, W//2, Cout)
    po_ref[0] = cp.reshape(H // 2, (W // 2) * Cout).astype(po_ref.dtype)


def _build_banded_weight(w_hwio, W):
    """HWIO (3,3,ci,co) -> (3, W*ci, W*co): one block-banded matrix per dy tap.

    band[dy, (j+dx-1)*ci + c, j*co + o] = w[dy, dx, c, o]  (zero outside the
    image => SAME padding along the W axis is baked into the band).
    """
    kh, kw, ci, co = w_hwio.shape
    band = jnp.zeros((kh, W * ci, W * co), w_hwio.dtype)
    for dx in range(kw):
        for j in range(W):
            src = j + dx - 1
            if 0 <= src < W:
                band = band.at[:, src * ci:(src + 1) * ci,
                               j * co:(j + 1) * co].set(w_hwio[:, dx])
    return band


def encoder_forward_nhwc(x_nhwc, w1, b1, w2, b2):
    """x_nhwc: (N, H, W, Cin) f32; w*: HWIO conv weights; returns (x, p) NHWC."""
    N, H, W, Cin = x_nhwc.shape
    Cout = w1.shape[-1]
    assert H % 2 == 0 and W % 2 == 0

    # Lane-dense, row-padded bf16 input: (N, H+2, W*Cin).
    xf = x_nhwc.reshape(N, H, W * Cin).astype(jnp.bfloat16)
    xp = jnp.pad(xf, ((0, 0), (1, 1), (0, 0)))

    # Block-banded bf16 weights + lane-dense f32 biases (built once, outside).
    w1b = _build_banded_weight(w1, W).astype(jnp.bfloat16)   # (3, W*Cin,  W*Cout)
    w2b = _build_banded_weight(w2, W).astype(jnp.bfloat16)   # (3, W*Cout, W*Cout)
    b1d = jnp.tile(b1, W).reshape(1, W * Cout).astype(jnp.float32)
    b2d = jnp.tile(b2, W).reshape(1, W * Cout).astype(jnp.float32)

    kernel = functools.partial(_encoder_kernel, H=H, W=W, Cout=Cout)

    grid_spec = pltpu.PrefetchScalarGridSpec(
        num_scalar_prefetch=0,
        grid=(N,),
        in_specs=[
            pl.BlockSpec((1, H + 2, W * Cin), lambda n: (n, 0, 0)),
            pl.BlockSpec((3, W * Cin, W * Cout), lambda n: (0, 0, 0)),
            pl.BlockSpec((1, W * Cout), lambda n: (0, 0)),
            pl.BlockSpec((3, W * Cout, W * Cout), lambda n: (0, 0, 0)),
            pl.BlockSpec((1, W * Cout), lambda n: (0, 0)),
        ],
        out_specs=[
            pl.BlockSpec((1, H, W * Cout), lambda n: (n, 0, 0)),
            pl.BlockSpec((1, H // 2, (W // 2) * Cout), lambda n: (n, 0, 0)),
        ],
    )

    xo, po = pl.pallas_call(
        kernel,
        out_shape=(
            jax.ShapeDtypeStruct((N, H, W * Cout), jnp.float32),
            jax.ShapeDtypeStruct((N, H // 2, (W // 2) * Cout), jnp.float32),
        ),
        grid_spec=grid_spec,
        compiler_params=pltpu.CompilerParams(
            dimension_semantics=("parallel",)),   # batch sharded across v7x TCs
    )(xp, w1b, b1d, w2b, b2d)

    x_out = xo.reshape(N, H, W, Cout)
    p_out = po.reshape(N, H // 2, W // 2, Cout)
    return x_out, p_out


def _ref_forward_nhwc(x, w1, b1, w2, b2):
    """Plain-JAX reference with the same bf16-operand / f32-accumulate numerics."""
    dn = ("NHWC", "HWIO", "NHWC")
    y = jax.lax.conv_general_dilated(
        x.astype(jnp.bfloat16), w1.astype(jnp.bfloat16), (1, 1), "SAME",
        dimension_numbers=dn, preferred_element_type=jnp.float32) + b1
    y = jnp.maximum(y, 0.0)
    y = jax.lax.conv_general_dilated(
        y.astype(jnp.bfloat16), w2.astype(jnp.bfloat16), (1, 1), "SAME",
        dimension_numbers=dn, preferred_element_type=jnp.float32) + b2
    y = jnp.maximum(y, 0.0)
    p = jax.lax.reduce_window(y, -jnp.inf, jax.lax.max,
                              (1, 2, 2, 1), (1, 2, 2, 1), "VALID")
    return y, p


if __name__ == "__main__":
    # Module config: Encoder(in_c=4, out_c=8, batch_norm=False)
    N, Cin, H, W = 2, 4, 16, 16
    Cout = 8

    key = jax.random.PRNGKey(0)
    k_x, k_w1, k_b1, k_w2, k_b2 = jax.random.split(key, 5)

    # Input in PyTorch NCHW convention, then transposed to the kernel's NHWC.
    x_nchw = jax.random.normal(k_x, (N, Cin, H, W), dtype=jnp.float32)
    x_nhwc = jnp.transpose(x_nchw, (0, 2, 3, 1))

    # Deterministic parameter init (PyTorch-style uniform bounds), HWIO layout.
    bound1 = 1.0 / jnp.sqrt(Cin * 3 * 3)
    w1 = jax.random.uniform(k_w1, (3, 3, Cin, Cout), jnp.float32, -bound1, bound1)
    b1 = jax.random.uniform(k_b1, (Cout,), jnp.float32, -bound1, bound1)
    bound2 = 1.0 / jnp.sqrt(Cout * 3 * 3)
    w2 = jax.random.uniform(k_w2, (3, 3, Cout, Cout), jnp.float32, -bound2, bound2)
    b2 = jax.random.uniform(k_b2, (Cout,), jnp.float32, -bound2, bound2)

    x_out, p_out = encoder_forward_nhwc(x_nhwc, w1, b1, w2, b2)
    jax.block_until_ready((x_out, p_out))

    # Correctness check vs plain-JAX reference (bf16 operands, f32 accumulation).
    x_ref, p_ref = _ref_forward_nhwc(x_nhwc, w1, b1, w2, b2)
    assert x_out.shape == (N, H, W, Cout)
    assert p_out.shape == (N, H // 2, W // 2, Cout)
    assert jnp.allclose(x_out, x_ref, atol=2e-2, rtol=2e-2)
    assert jnp.allclose(p_out, p_ref, atol=2e-2, rtol=2e-2)

    print("KERNEL_OK")
</pallas_src>

<mosaic_0001>
module attributes {stable_mosaic.version = 11 : i64} {
  func.func @_encoder_kernel(%arg0: i32, %arg1: memref<1x18x64xbf16, #tpu.memory_space<vmem>>, %arg2: memref<3x64x128xbf16, #tpu.memory_space<vmem>>, %arg3: memref<1x128xf32, #tpu.memory_space<vmem>>, %arg4: memref<3x128x128xbf16, #tpu.memory_space<vmem>>, %arg5: memref<1x128xf32, #tpu.memory_space<vmem>>, %arg6: memref<1x16x128xf32, #tpu.memory_space<vmem>>, %arg7: memref<1x8x64xf32, #tpu.memory_space<vmem>>) attributes {dimension_semantics = [#tpu.dimension_semantics<parallel>], iteration_bounds = array<i64: 2>, scalar_prefetch = 0 : i64, scratch_operands = 0 : i64, tpu.core_type = #tpu.core_type<tc>, window_params = [{transform_indices = @transform_0, window_bounds = array<i64: 1, 18, 64>}, {pipeline_mode = #tpu.pipeline_mode<synchronous>, transform_indices = @transform_1, window_bounds = array<i64: 3, 64, 128>}, {pipeline_mode = #tpu.pipeline_mode<synchronous>, transform_indices = @transform_2, window_bounds = array<i64: 1, 128>}, {pipeline_mode = #tpu.pipeline_mode<synchronous>, transform_indices = @transform_3, window_bounds = array<i64: 3, 128, 128>}, {pipeline_mode = #tpu.pipeline_mode<synchronous>, transform_indices = @transform_4, window_bounds = array<i64: 1, 128>}, {transform_indices = @transform_5, window_bounds = array<i64: 1, 16, 128>}, {transform_indices = @transform_6, window_bounds = array<i64: 1, 8, 64>}]} {
    %c0 = arith.constant 0 : index
    %c0_0 = arith.constant 0 : index
    %c0_1 = arith.constant 0 : index
    %0 = vector.load %arg1[%c0, %c0_0, %c0_1] : memref<1x18x64xbf16, #tpu.memory_space<vmem>>, vector<1x18x64xbf16>
    %1 = vector.shape_cast %0 : vector<1x18x64xbf16> to vector<18x64xbf16>
    %c0_2 = arith.constant 0 : index
    %c0_3 = arith.constant 0 : index
    %2 = vector.load %arg3[%c0_2, %c0_3] : memref<1x128xf32, #tpu.memory_space<vmem>>, vector<1x128xf32>
    %3 = vector.shape_cast %2 : vector<1x128xf32> to vector<1x128xf32>
    %4 = vector.broadcast %3 : vector<1x128xf32> to vector<16x128xf32>
    %5 = vector.extract_strided_slice %1 {offsets = [0, 0], sizes = [16, 64], strides = [1, 1]} : vector<18x64xbf16> to vector<16x64xbf16>
    %c0_4 = arith.constant 0 : index
    %c0_5 = arith.constant 0 : index
    %c0_6 = arith.constant 0 : index
    %6 = vector.load %arg2[%c0_4, %c0_5, %c0_6] : memref<3x64x128xbf16, #tpu.memory_space<vmem>>, vector<1x64x128xbf16>
    %7 = vector.shape_cast %6 : vector<1x64x128xbf16> to vector<64x128xbf16>
    %cst = arith.constant dense<0.000000e+00> : vector<16x128xf32>
    %8 = tpu.matmul %5, %7, %cst {dimension_numbers = #tpu.dot_dimension_numbers<[1], [0], [0], [1], [0, 0, 1, 1], [], []>} : vector<16x64xbf16>, vector<64x128xbf16>, vector<16x128xf32> -> vector<16x128xf32>
    %9 = arith.addf %4, %8 : vector<16x128xf32>
    %10 = vector.extract_strided_slice %1 {offsets = [1, 0], sizes = [16, 64], strides = [1, 1]} : vector<18x64xbf16> to vector<16x64xbf16>
    %c1 = arith.constant 1 : index
    %c0_7 = arith.constant 0 : index
    %c0_8 = arith.constant 0 : index
    %11 = vector.load %arg2[%c1, %c0_7, %c0_8] : memref<3x64x128xbf16, #tpu.memory_space<vmem>>, vector<1x64x128xbf16>
    %12 = vector.shape_cast %11 : vector<1x64x128xbf16> to vector<64x128xbf16>
    %cst_9 = arith.constant dense<0.000000e+00> : vector<16x128xf32>
    %13 = tpu.matmul %10, %12, %cst_9 {dimension_numbers = #tpu.dot_dimension_numbers<[1], [0], [0], [1], [0, 0, 1, 1], [], []>} : vector<16x64xbf16>, vector<64x128xbf16>, vector<16x128xf32> -> vector<16x128xf32>
    %14 = arith.addf %9, %13 : vector<16x128xf32>
    %15 = vector.extract_strided_slice %1 {offsets = [2, 0], sizes = [16, 64], strides = [1, 1]} : vector<18x64xbf16> to vector<16x64xbf16>
    %c2 = arith.constant 2 : index
    %c0_10 = arith.constant 0 : index
    %c0_11 = arith.constant 0 : index
    %16 = vector.load %arg2[%c2, %c0_10, %c0_11] : memref<3x64x128xbf16, #tpu.memory_space<vmem>>, vector<1x64x128xbf16>
    %17 = vector.shape_cast %16 : vector<1x64x128xbf16> to vector<64x128xbf16>
    %cst_12 = arith.constant dense<0.000000e+00> : vector<16x128xf32>
    %18 = tpu.matmul %15, %17, %cst_12 {dimension_numbers = #tpu.dot_dimension_numbers<[1], [0], [0], [1], [0, 0, 1, 1], [], []>} : vector<16x64xbf16>, vector<64x128xbf16>, vector<16x128xf32> -> vector<16x128xf32>
    %19 = arith.addf %14, %18 : vector<16x128xf32>
    %cst_13 = arith.constant 0.000000e+00 : f32
    %20 = vector.broadcast %cst_13 : f32 to vector<16x128xf32>
    %21 = arith.maximumf %19, %20 : vector<16x128xf32>
    %cst_14 = arith.constant 0.000000e+00 : f32
    %22 = vector.broadcast %cst_14 : f32 to vector<1x128xf32>
    %23 = tpu.concatenate %22, %21, %22 in 0 : vector<1x128xf32>, vector<16x128xf32>, vector<1x128xf32> -> vector<18x128xf32>
    %24 = arith.truncf %23 : vector<18x128xf32> to vector<18x128xbf16>
    %c0_15 = arith.constant 0 : index
    %c0_16 = arith.constant 0 : index
    %25 = vector.load %arg5[%c0_15, %c0_16] : memref<1x128xf32, #tpu.memory_space<vmem>>, vector<1x128xf32>
    %26 = vector.shape_cast %25 : vector<1x128xf32> to vector<1x128xf32>
    %27 = vector.broadcast %26 : vector<1x128xf32> to vector<16x128xf32>
    %28 = vector.extract_strided_slice %24 {offsets = [0, 0], sizes = [16, 128], strides = [1, 1]} : vector<18x128xbf16> to vector<16x128xbf16>
    %c0_17 = arith.constant 0 : index
    %c0_18 = arith.constant 0 : index
    %c0_19 = arith.constant 0 : index
    %29 = vector.load %arg4[%c0_17, %c0_18, %c0_19] : memref<3x128x128xbf16, #tpu.memory_space<vmem>>, vector<1x128x128xbf16>
    %30 = vector.shape_cast %29 : vector<1x128x128xbf16> to vector<128x128xbf16>
    %cst_20 = arith.constant dense<0.000000e+00> : vector<16x128xf32>
    %31 = tpu.matmul %28, %30, %cst_20 {dimension_numbers = #tpu.dot_dimension_numbers<[1], [0], [0], [1], [0, 0, 1, 1], [], []>} : vector<16x128xbf16>, vector<128x128xbf16>, vector<16x128xf32> -> vector<16x128xf32>
    %32 = arith.addf %27, %31 : vector<16x128xf32>
    %33 = vector.extract_strided_slice %24 {offsets = [1, 0], sizes = [16, 128], strides = [1, 1]} : vector<18x128xbf16> to vector<16x128xbf16>
    %c1_21 = arith.constant 1 : index
    %c0_22 = arith.constant 0 : index
    %c0_23 = arith.constant 0 : index
    %34 = vector.load %arg4[%c1_21, %c0_22, %c0_23] : memref<3x128x128xbf16, #tpu.memory_space<vmem>>, vector<1x128x128xbf16>
    %35 = vector.shape_cast %34 : vector<1x128x128xbf16> to vector<128x128xbf16>
    %cst_24 = arith.constant dense<0.000000e+00> : vector<16x128xf32>
    %36 = tpu.matmul %33, %35, %cst_24 {dimension_numbers = #tpu.dot_dimension_numbers<[1], [0], [0], [1], [0, 0, 1, 1], [], []>} : vector<16x128xbf16>, vector<128x128xbf16>, vector<16x128xf32> -> vector<16x128xf32>
    %37 = arith.addf %32, %36 : vector<16x128xf32>
    %38 = vector.extract_strided_slice %24 {offsets = [2, 0], sizes = [16, 128], strides = [1, 1]} : vector<18x128xbf16> to vector<16x128xbf16>
    %c2_25 = arith.constant 2 : index
    %c0_26 = arith.constant 0 : index
    %c0_27 = arith.constant 0 : index
    %39 = vector.load %arg4[%c2_25, %c0_26, %c0_27] : memref<3x128x128xbf16, #tpu.memory_space<vmem>>, vector<1x128x128xbf16>
    %40 = vector.shape_cast %39 : vector<1x128x128xbf16> to vector<128x128xbf16>
    %cst_28 = arith.constant dense<0.000000e+00> : vector<16x128xf32>
    %41 = tpu.matmul %38, %40, %cst_28 {dimension_numbers = #tpu.dot_dimension_numbers<[1], [0], [0], [1], [0, 0, 1, 1], [], []>} : vector<16x128xbf16>, vector<128x128xbf16>, vector<16x128xf32> -> vector<16x128xf32>
    %42 = arith.addf %37, %41 : vector<16x128xf32>
    %cst_29 = arith.constant 0.000000e+00 : f32
    %43 = vector.broadcast %cst_29 : f32 to vector<16x128xf32>
    %44 = arith.maximumf %42, %43 : vector<16x128xf32>
    %c0_30 = arith.constant 0 : index
    %c0_31 = arith.constant 0 : index
    %c0_32 = arith.constant 0 : index
    %45 = vector.load %arg6[%c0_30, %c0_31, %c0_32] : memref<1x16x128xf32, #tpu.memory_space<vmem>>, vector<1x16x128xf32>
    %46 = vector.shape_cast %45 : vector<1x16x128xf32> to vector<16x128xf32>
    %47 = vector.shape_cast %44 : vector<16x128xf32> to vector<1x16x128xf32>
    tpu.vector_store %arg6[%c0_30, %c0_31, %c0_32], %47 {strides = array<i32>} : memref<1x16x128xf32, #tpu.memory_space<vmem>>, vector<1x16x128xf32>,
    %48 = vector.shape_cast %44 : vector<16x128xf32> to vector<8x2x128xf32>
    %cst_33 = arith.constant dense<0xFF800000> : vector<8x128xf32>
    %49 = vector.multi_reduction <maximumf>, %48, %cst_33 [1] : vector<8x2x128xf32> to vector<8x128xf32>
    %50 = vector.shape_cast %49 : vector<8x128xf32> to vector<8x8x16xf32>
    %51 = vector.extract_strided_slice %50 {offsets = [0, 0, 0], sizes = [8, 8, 8], strides = [1, 1, 1]} : vector<8x8x16xf32> to vector<8x8x8xf32>
    %52 = vector.extract_strided_slice %50 {offsets = [0, 0, 8], sizes = [8, 8, 8], strides = [1, 1, 1]} : vector<8x8x16xf32> to vector<8x8x8xf32>
    %53 = arith.maximumf %51, %52 : vector<8x8x8xf32>
    %54 = vector.shape_cast %53 : vector<8x8x8xf32> to vector<8x64xf32>
    %c0_34 = arith.constant 0 : index
    %c0_35 = arith.constant 0 : index
    %c0_36 = arith.constant 0 : index
    %55 = vector.load %arg7[%c0_34, %c0_35, %c0_36] : memref<1x8x64xf32, #tpu.memory_space<vmem>>, vector<1x8x64xf32>
    %56 = vector.shape_cast %55 : vector<1x8x64xf32> to vector<8x64xf32>
    %57 = vector.shape_cast %54 : vector<8x64xf32> to vector<1x8x64xf32>
    tpu.vector_store %arg7[%c0_34, %c0_35, %c0_36], %57 {strides = array<i32>} : memref<1x8x64xf32, #tpu.memory_space<vmem>>, vector<1x8x64xf32>,
    return
  }
  func.func @transform_0(%arg0: i32) -> (i32, i32, i32) {
    %c0_i32 = arith.constant 0 : i32
    %c0_i32_0 = arith.constant 0 : i32
    %c0_i32_1 = arith.constant 0 : i32
    return %arg0, %c0_i32, %c0_i32_0 : i32, i32, i32
  }
  func.func @transform_1(%arg0: i32) -> (i32, i32, i32) {
    %c0_i32 = arith.constant 0 : i32
    %c0_i32_0 = arith.constant 0 : i32
    %c0_i32_1 = arith.constant 0 : i32
    %c0_i32_2 = arith.constant 0 : i32
    return %c0_i32, %c0_i32_0, %c0_i32_1 : i32, i32, i32
  }
  func.func @transform_2(%arg0: i32) -> (i32, i32) {
    %c0_i32 = arith.constant 0 : i32
    %c0_i32_0 = arith.constant 0 : i32
    %c0_i32_1 = arith.constant 0 : i32
    return %c0_i32, %c0_i32_0 : i32, i32
  }
  func.func @transform_3(%arg0: i32) -> (i32, i32, i32) {
    %c0_i32 = arith.constant 0 : i32
    %c0_i32_0 = arith.constant 0 : i32
    %c0_i32_1 = arith.constant 0 : i32
    %c0_i32_2 = arith.constant 0 : i32
    return %c0_i32, %c0_i32_0, %c0_i32_1 : i32, i32, i32
  }
  func.func @transform_4(%arg0: i32) -> (i32, i32) {
    %c0_i32 = arith.constant 0 : i32
    %c0_i32_0 = arith.constant 0 : i32
    %c0_i32_1 = arith.constant 0 : i32
    return %c0_i32, %c0_i32_0 : i32, i32
  }
  func.func @transform_5(%arg0: i32) -> (i32, i32, i32) {
    %c0_i32 = arith.constant 0 : i32
    %c0_i32_0 = arith.constant 0 : i32
    %c0_i32_1 = arith.constant 0 : i32
    return %arg0, %c0_i32, %c0_i32_0 : i32, i32, i32
  }
  func.func @transform_6(%arg0: i32) -> (i32, i32, i32) {
    %c0_i32 = arith.constant 0 : i32
    %c0_i32_0 = arith.constant 0 : i32
    %c0_i32_1 = arith.constant 0 : i32
    return %arg0, %c0_i32, %c0_i32_0 : i32, i32, i32
  }
}

</mosaic_0001>

<llo_original>
// kernel: tpu_custom_call.1
$region0: #{tpu_custom_call.1}
  #allocation0 [shape = 'u32[]', space=smem, size = 0x4, offset = 0x4, fixed_abs, tag = 'smem constant byte address 0x4 - core index']
  #allocation1 [shape = 'u32[144,128]{1,0:T(1,128)}', space=vmem, size = 0x12000, scoped, tag = 'internal scratch']
  %s0 = inlined_call_operand.vmem [shape: bf16[2,18,64], index: 0, kind: input, shape index: {}]
  %s1 = inlined_call_operand.hbm [shape: bf16[3,64,128], index: 1, kind: input, shape index: {}]
  %s2 = inlined_call_operand.vmem [shape: f32[1,128], index: 2, kind: input, shape index: {}]
  %s3 = inlined_call_operand.hbm [shape: bf16[3,128,128], index: 3, kind: input, shape index: {}]
  %s4 = inlined_call_operand.vmem [shape: f32[1,128], index: 4, kind: input, shape index: {}]
  %s5 = inlined_call_operand.hbm [shape: f32[2,16,128], index: 5, kind: output, shape index: {0}]
  %s6 = inlined_call_operand.hbm [shape: f32[2,8,64], index: 6, kind: output, shape index: {1}]
  %7 = xla_tuple %s5, %s6
  %s8 = sld [smem:[#allocation0]]
  $region69: #{tpu_custom_call.1} parent=0
    _
  %s10 = ssub.s32 1, %s8
  %s11 = scalar_select 0, %s10, %s8
  $region1: #{tpu_custom_call.1} parent=0
    #allocation2 [shape = 'u8[49152]{0}', space=vmem, size = 0xc000, scoped, tag = 'input window, operand 1, single buffered']
    #allocation3 [shape = 's32[2]{0}', space=sflag, size = 0x8, scoped, tag = 'scoped memory for tpu_custom_call.1']
    #allocation4 [shape = 's32[2]{0}', space=sflag, size = 0x8, scoped, tag = 'scoped memory for tpu_custom_call.1']
    #allocation5 [shape = 'u8[98304]{0}', space=vmem, size = 0x18000, scoped, tag = 'input window, operand 3, single buffered']
    #allocation6 [shape = 's32[1]{0}', space=sflag, size = 0x4, scoped, tag = 'scoped memory for tpu_custom_call.1']
    #allocation7 [shape = 'u8[16384]{0}', space=vmem, size = 0x4000, scoped, tag = 'output window, operand 0']
    #allocation8 [shape = 'u8[8192]{0}', space=vmem, size = 0x2000, scoped, tag = 'output window, operand 1']
    #allocation9 [shape = 's32[2]{0}', space=sflag, size = 0x8, scoped, tag = 'scoped memory for tpu_custom_call.1']
    %12 = vsyncpa [#allocation3], 0
    %13 = vsyncpa [#allocation6], 0
    %14 = vsyncpa [#allocation4], 0
    %s15 = scalar_lea.sflag [#allocation4], 1
    %16 = vsyncpa %s15, 0
    %17 = vsyncpa [#allocation9], 0
    %s18 = scalar_lea.sflag [#allocation9], 1
    %19 = vsyncpa %s18, 0
    loop: start=0, step=1, limit=4
    $region2: #{tpu_custom_call.1} parent=1 // loop_pre_header
      _
    $region3: #{tpu_custom_call.1} parent=1 // loop_header
      %s21 = sphi 0, %s25
      %p22 = scmp.ge.s32.totalorder %s21, 4
      %s31 = sphi 0, %s33
      %s34 = sphi 0, %s31
      %s35 = sphi 0, %s34
      %s51 = sphi 0, %s35
      %s55 = sphi 0, %s55
      %s57 = sphi 0, %s55
      %s58 = sphi 0, %s57
      %s72 = sphi 0, %s58
      %s76 = sphi 0, %s76
      %s78 = sphi 0, %s76
      %s79 = sphi 0, %s78
      %s93 = sphi 0, %s79
      %s97 = sphi 0, %s97
      %s99 = sphi 0, %s97
      %s100 = sphi 0, %s99
      %s114 = sphi 0, %s100
      %s118 = sphi 0, %s118
      %s120 = sphi 0, %s118
      %s121 = sphi 0, %s120
      %s135 = sphi 0, %s121
      %s141 = sphi 0, %s143
      %s144 = sphi 0, %s141
      %s145 = sphi 0, %s144
      %s161 = sphi 0, %s145
      %s167 = sphi 0, %s169
      %s170 = sphi 0, %s167
      %s171 = sphi 0, %s170
      %s187 = sphi 0, %s171
    $region4: #{tpu_custom_call.1} parent=1 // loop_header_branch
      %24 = sbr.rel (%p22) target = $region8
    $region5: #{tpu_custom_call.1} parent=1 // loop_body
      %s26 = ssub.s32 %s21, 1
      %s27 = ssub.s32 %s21, 2
      %s28 = sadd.s32 %s21, 1
      %s29 = ssub.s32 %s21, %s28
      %p30 = scmp.eq.s32.totalorder %s29, 0
      %s32 = sadd.s32 %s31, 1
      %s33 = scalar_select %p30, %s31, %s32
      %p36 = pneg %p30
      %p37 = scmp.eq.s32.totalorder %s21, 1
      %p38 = por %p36, %p37
      %p39 = scmp.ne.s32.totalorder %s31, %s34
      %p40 = scmp.eq.s32.totalorder %s21, 0
      %p41 = por %p39, %p40
      %p42 = scmp.ne.s32.totalorder %s31, %s34
      %p43 = scmp.eq.s32.totalorder %s26, 1
      %p44 = por %p42, %p43
      %p45 = scmp.ne.s32.totalorder %s34, %s35
      %p46 = scmp.eq.s32.totalorder %s26, 0
      %p47 = por %p45, %p46
      %p48 = scmp.ne.s32.totalorder %s34, %s35
      %p49 = scmp.eq.s32.totalorder %s27, 1
      %p50 = por %p48, %p49
      %p52 = scmp.ne.s32.totalorder %s35, %s51
      %p53 = scmp.eq.s32.totalorder %s27, 0
      %p54 = por %p52, %p53
      %s56 = sadd.s32 %s55, 1
      %p59 = scmp.eq.s32.totalorder %s21, 1
      %p60 = scmp.ne.s32.totalorder %s55, %s57
      %p61 = scmp.eq.s32.totalorder %s21, 0
      %p62 = por %p60, %p61
      %p63 = scmp.ne.s32.totalorder %s55, %s57
      %p64 = scmp.eq.s32.totalorder %s26, 1
      %p65 = por %p63, %p64
      %p66 = scmp.ne.s32.totalorder %s57, %s58
      %p67 = scmp.eq.s32.totalorder %s26, 0
      %p68 = por %p66, %p67
      %p69 = scmp.ne.s32.totalorder %s57, %s58
      %p70 = scmp.eq.s32.totalorder %s27, 1
      %p71 = por %p69, %p70
      %p73 = scmp.ne.s32.totalorder %s58, %s72
      %p74 = scmp.eq.s32.totalorder %s27, 0
      %p75 = por %p73, %p74
      %s77 = sadd.s32 %s76, 1
      %p80 = scmp.eq.s32.totalorder %s21, 1
      %p81 = scmp.ne.s32.totalorder %s76, %s78
      %p82 = scmp.eq.s32.totalorder %s21, 0
      %p83 = por %p81, %p82
      %p84 = scmp.ne.s32.totalorder %s76, %s78
      %p85 = scmp.eq.s32.totalorder %s26, 1
      %p86 = por %p84, %p85
      %p87 = scmp.ne.s32.totalorder %s78, %s79
      %p88 = scmp.eq.s32.totalorder %s26, 0
      %p89 = por %p87, %p88
      %p90 = scmp.ne.s32.totalorder %s78, %s79
      %p91 = scmp.eq.s32.totalorder %s27, 1
      %p92 = por %p90, %p91
      %p94 = scmp.ne.s32.totalorder %s79, %s93
      %p95 = scmp.eq.s32.totalorder %s27, 0
      %p96 = por %p94, %p95
      %s98 = sadd.s32 %s97, 1
      %p101 = scmp.eq.s32.totalorder %s21, 1
      %p102 = scmp.ne.s32.totalorder %s97, %s99
      %p103 = scmp.eq.s32.totalorder %s21, 0
      %p104 = por %p102, %p103
      %p105 = scmp.ne.s32.totalorder %s97, %s99
      %p106 = scmp.eq.s32.totalorder %s26, 1
      %p107 = por %p105, %p106
      %p108 = scmp.ne.s32.totalorder %s99, %s100
      %p109 = scmp.eq.s32.totalorder %s26, 0
      %p110 = por %p108, %p109
      %p111 = scmp.ne.s32.totalorder %s99, %s100
      %p112 = scmp.eq.s32.totalorder %s27, 1
      %p113 = por %p111, %p112
      %p115 = scmp.ne.s32.totalorder %s100, %s114
      %p116 = scmp.eq.s32.totalorder %s27, 0
      %p117 = por %p115, %p116
      %s119 = sadd.s32 %s118, 1
      %p122 = scmp.eq.s32.totalorder %s21, 1
      %p123 = scmp.ne.s32.totalorder %s118, %s120
      %p124 = scmp.eq.s32.totalorder %s21, 0
      %p125 = por %p123, %p124
      %p126 = scmp.ne.s32.totalorder %s118, %s120
      %p127 = scmp.eq.s32.totalorder %s26, 1
      %p128 = por %p126, %p127
      %p129 = scmp.ne.s32.totalorder %s120, %s121
      %p130 = scmp.eq.s32.totalorder %s26, 0
      %p131 = por %p129, %p130
      %p132 = scmp.ne.s32.totalorder %s120, %s121
      %p133 = scmp.eq.s32.totalorder %s27, 1
      %p134 = por %p132, %p133
      %p136 = scmp.ne.s32.totalorder %s121, %s135
      %p137 = scmp.eq.s32.totalorder %s27, 0
      %p138 = por %p136, %p137
      %s139 = ssub.s32 %s21, %s28
      %p140 = scmp.eq.s32.totalorder %s139, 0
      %s142 = sadd.s32 %s141, 1
      %s143 = scalar_select %p140, %s141, %s142
      %p146 = pneg %p140
      %p147 = scmp.eq.s32.totalorder %s21, 1
      %p148 = por %p146, %p147
      %p149 = scmp.ne.s32.totalorder %s141, %s144
      %p150 = scmp.eq.s32.totalorder %s21, 0
      %p151 = por %p149, %p150
      %p152 = scmp.ne.s32.totalorder %s141, %s144
      %p153 = scmp.eq.s32.totalorder %s26, 1
      %p154 = por %p152, %p153
      %p155 = scmp.ne.s32.totalorder %s144, %s145
      %p156 = scmp.eq.s32.totalorder %s26, 0
      %p157 = por %p155, %p156
      %p158 = scmp.ne.s32.totalorder %s144, %s145
      %p159 = scmp.eq.s32.totalorder %s27, 1
      %p160 = por %p158, %p159
      %p162 = scmp.ne.s32.totalorder %s145, %s161
      %p163 = scmp.eq.s32.totalorder %s27, 0
      %p164 = por %p162, %p163
      %s165 = ssub.s32 %s21, %s28
      %p166 = scmp.eq.s32.totalorder %s165, 0
      %s168 = sadd.s32 %s167, 1
      %s169 = scalar_select %p166, %s167, %s168
      %p172 = pneg %p166
      %p173 = scmp.eq.s32.totalorder %s21, 1
      %p174 = por %p172, %p173
      %p175 = scmp.ne.s32.totalorder %s167, %s170
      %p176 = scmp.eq.s32.totalorder %s21, 0
      %p177 = por %p175, %p176
      %p178 = scmp.ne.s32.totalorder %s167, %s170
      %p179 = scmp.eq.s32.totalorder %s26, 1
      %p180 = por %p178, %p179
      %p181 = scmp.ne.s32.totalorder %s170, %s171
      %p182 = scmp.eq.s32.totalorder %s26, 0
      %p183 = por %p181, %p182
      %p184 = scmp.ne.s32.totalorder %s170, %s171
      %p185 = scmp.eq.s32.totalorder %s27, 1
      %p186 = por %p184, %p185
      %p188 = scmp.ne.s32.totalorder %s171, %s187
      %p189 = scmp.eq.s32.totalorder %s27, 0
      %p190 = por %p188, %p189
      %p191 = scmp.le.s32.totalorder 1, %s21
      %p192 = scmp.lt.s32.totalorder %s21, 3
      %p193 = pnand %p191, %p192
      %p194 = pneg %p193
      // Predicated region
      $region9: #{tpu_custom_call.1} parent=5 // pred_check
        _
      $region10: #{tpu_custom_call.1} parent=5 // pred_check_branch
        %196 = sbr.rel (%p193) target = $region12
      $region11: #{tpu_custom_call.1} parent=5 // pred_region
        %s197 = ssub.s32 %s21, 1
        // Predicated region
        $region13: #{tpu_custom_call.1} parent=11 // pred_check
          %p198 = pneg %p68
        $region14: #{tpu_custom_call.1} parent=11 // pred_check_branch
          %200 = sbr.rel (%p198) target = $region16
        $region15: #{tpu_custom_call.1} parent=11 // pred_region
          %s202 = ssub.s32 1536, 1536
          %203 = vsyncadd [#allocation3], %s202
          %s204 = sshll.u32 [#allocation2], 4
          %s205 = int_to_ptr.vmem [resolvable:$true] %s204
          %210 = dma.hbm_to_vmem [thread:$0]  %s1, 1536, %s205, [#allocation3], 64, 64, 4
        $region16: #{tpu_custom_call.1} parent=11 // pred_fallthru
          _
        // Predicated region
        $region17: #{tpu_custom_call.1} parent=11 // pred_check
          %p211 = pneg %p89
        $region18: #{tpu_custom_call.1} parent=11 // pred_check_branch
          %213 = sbr.rel (%p211) target = $region20
        $region19: #{tpu_custom_call.1} parent=11 // pred_region
          _
        $region20: #{tpu_custom_call.1} parent=11 // pred_fallthru
          _
        // Predicated region
        $region21: #{tpu_custom_call.1} parent=11 // pred_check
          %p214 = pneg %p110
        $region22: #{tpu_custom_call.1} parent=11 // pred_check_branch
          %216 = sbr.rel (%p214) target = $region24
        $region23: #{tpu_custom_call.1} parent=11 // pred_region
          %s218 = ssub.s32 3072, 3072
          %219 = vsyncadd [#allocation6], %s218
          %s220 = sshll.u32 [#allocation5], 4
          %s221 = int_to_ptr.vmem [resolvable:$true] %s220
          %226 = dma.hbm_to_vmem [thread:$0]  %s3, 3072, %s221, [#allocation6], 64, 64, 4
        $region24: #{tpu_custom_call.1} parent=11 // pred_fallthru
          _
        // Predicated region
        $region25: #{tpu_custom_call.1} parent=11 // pred_check
          %p227 = pneg %p131
        $region26: #{tpu_custom_call.1} parent=11 // pred_check_branch
          %229 = sbr.rel (%p227) target = $region28
        $region27: #{tpu_custom_call.1} parent=11 // pred_region
          _
        $region28: #{tpu_custom_call.1} parent=11 // pred_fallthru
          _
      $region12: #{tpu_custom_call.1} parent=5 // pred_fallthru
        _
      %p230 = scmp.lt.s32.totalorder %s21, 2
      // Predicated region
      $region29: #{tpu_custom_call.1} parent=5 // pred_check
        %p231 = pneg %p230
      $region30: #{tpu_custom_call.1} parent=5 // pred_check_branch
        %233 = sbr.rel (%p231) target = $region32
      $region31: #{tpu_custom_call.1} parent=5 // pred_region
        // Predicated region
        $region33: #{tpu_custom_call.1} parent=31 // pred_check
          %p234 = pneg %p41
        $region34: #{tpu_custom_call.1} parent=31 // pred_check_branch
          %236 = sbr.rel (%p234) target = $region36
        $region35: #{tpu_custom_call.1} parent=31 // pred_region
          %p237 = scmp.lt.s32.totalorder %s21, 1
          %s238 = scalar_select %p237, %s21, 1
          %s239 = smul.addr %s238, 3
          %s240 = smul.addr %s239, 4
          %s241 = scalar_lea.vmem %s0, %s240
        $region36: #{tpu_custom_call.1} parent=31 // pred_fallthru
          _
      $region32: #{tpu_custom_call.1} parent=5 // pred_fallthru
        _
      %p242 = scmp.le.s32.totalorder 1, %s21
      %p243 = scmp.lt.s32.totalorder %s21, 3
      %p244 = pnand %p242, %p243
      %p245 = pneg %p244
      // Predicated region
      $region37: #{tpu_custom_call.1} parent=5 // pred_check
        _
      $region38: #{tpu_custom_call.1} parent=5 // pred_check_branch
        %247 = sbr.rel (%p244) target = $region40
      $region39: #{tpu_custom_call.1} parent=5 // pred_region
        %s248 = ssub.s32 %s21, 1
        // Predicated region
        $region41: #{tpu_custom_call.1} parent=39 // pred_check
          %p249 = pneg %p68
        $region42: #{tpu_custom_call.1} parent=39 // pred_check_branch
          %251 = sbr.rel (%p249) target = $region44
        $region43: #{tpu_custom_call.1} parent=39 // pred_region
          %252 = dma.done [#allocation3], 1536
        $region44: #{tpu_custom_call.1} parent=39 // pred_fallthru
          _
        // Predicated region
        $region45: #{tpu_custom_call.1} parent=39 // pred_check
          %p253 = pneg %p110
        $region46: #{tpu_custom_call.1} parent=39 // pred_check_branch
          %255 = sbr.rel (%p253) target = $region48
        $region47: #{tpu_custom_call.1} parent=39 // pred_region
          %256 = dma.done [#allocation6], 3072
        $region48: #{tpu_custom_call.1} parent=39 // pred_fallthru
          _
        %p257 = scmp.lt.s32.totalorder %s26, 1
        %s258 = scalar_select %p257, %s26, 1
        %s259 = smul.addr %s258, 3
        %s260 = smul.addr %s259, 4
        %s261 = scalar_lea.vmem %s0, %s260
        %p262 = pneg %p47
        %p263 = pneg %p44
        %p264 = pneg %p68
        %p265 = pneg %p65
        %p266 = pneg %p89
        %p267 = pneg %p86
        %p268 = pneg %p110
        %p269 = pneg %p107
        %p270 = pneg %p131
        %p271 = pneg %p128
        %p272 = pneg %p157
        %p273 = pneg %p154
        %s274 = sand.u32 %s144, 1
        %s275 = scalar_lea.sflag [#allocation4], %s274
        %s276 = sand.u32 %s144, 1
        %s277 = smul.addr %s276, 16
        %s278 = scalar_lea.vmem [#allocation7], %s277
        %p279 = pneg %p183
        %p280 = pneg %p180
        %s281 = sand.u32 %s170, 1
        %s282 = scalar_lea.sflag [#allocation9], %s281
        %s283 = sand.u32 %s170, 1
        %s284 = smul.addr %s283, 8
        %s285 = scalar_lea.vmem [#allocation8], %s284
        %p286 = scmp.lt.s32.totalorder %s26, 1
        %s287 = scalar_select %p286, %s26, 1
        %s288 = smul.addr %s287, 3
        %s289 = smul.addr %s288, 4
        %s290 = scalar_lea.vmem %s0, %s289
        %v292 = vld [vmem:[%s290] sm:$0xf]
        %v293 = vld [vmem:[%s290 + $0x4] sm:$0xf]
        %v294 = vld [vmem:[%s290 + $0x8] sm:$0x1]
        %v295 = vld [vmem:[%s2] sm:$0x1]
        %v297 = vlaneseq
        %v298 = vshrl.u32 %v297, 7
        %v299 = vsub.s32 0, %v298
        %v300 = vrot.slane %v295, %v299
        %v302 = vld [vmem:[#allocation2] sm:$0xf]
        %v303 = vld [vmem:[#allocation2 + $0x4] sm:$0xf]
        %v304 = vld [vmem:[#allocation2 + $0x8] sm:$0xf]
        %v305 = vld [vmem:[#allocation2 + $0xc] sm:$0xf]
        %v306 = vld [vmem:[#allocation2 + $0x10] sm:$0xf]
        %v307 = vld [vmem:[#allocation2 + $0x14] sm:$0xf]
        %v308 = vld [vmem:[#allocation2 + $0x18] sm:$0xf]
        %v309 = vld [vmem:[#allocation2 + $0x1c] sm:$0xf]
        %v312 = vunpack.c.l.b16 %v292
        %v313 = vunpack.c.l.b16 %v293
        %v314 = vpack.c.b16 %v313, %v312
        %v323 = vunpack.c.l.b16 %v302
        %v324 = vunpack.c.l.b16 %v303
        %v325 = vunpack.c.l.b16 %v304
        %v326 = vunpack.c.l.b16 %v305
        %v327 = vunpack.c.l.b16 %v306
        %v328 = vunpack.c.l.b16 %v307
        %v329 = vunpack.c.l.b16 %v308
        %v330 = vunpack.c.l.b16 %v309
        %v331 = vpack.c.b16 %v324, %v323
        %v332 = vpack.c.b16 %v326, %v325
        %v333 = vpack.c.b16 %v328, %v327
        %v334 = vpack.c.b16 %v330, %v329
        %vm339 = vcmask 523264
        %v341 = vsel %vm339, %v314, 0
        %343 = vmatprep.subr.bf16.mxu0 0
        %344 = vmatpush1.bf16.msra.mxu0 %v331
        %345 = vmatprep.subr.bf16.mxu0 0
        %346 = vmatpush1.bf16.msra.mxu0 %v332
        %347 = vmatprep.subr.bf16.mxu0 0
        %348 = vmatpush1.bf16.msra.mxu0 %v333
        %349 = vmatprep.subr.bf16.mxu0 0
        %350 = vmatpush1.bf16.msra.mxu0 %v334
        %351 = vmatprep.subr.bf16.mxu0 0
        %352 = vmatpush1.bf16.msra.mxu0 0
        %353 = vmatprep.subr.bf16.mxu0 0
        %354 = vmatpush1.bf16.msra.mxu0 0
        %355 = vmatprep.subr.bf16.mxu0 0
        %356 = vmatpush1.bf16.msra.mxu0 0
        %357 = vmatprep.subr.bf16.mxu0 0
        %358 = vmatpush1.bf16.msra.mxu0 0
        %359 = vmatprep.subr.bf16.mxu0 0
        %360 = vmatpush1.bf16.msra.mxu0 0
        %361 = vmatprep.subr.bf16.mxu0 0
        %362 = vmatpush1.bf16.msra.mxu0 0
        %363 = vmatprep.subr.bf16.mxu0 0
        %364 = vmatpush1.bf16.msra.mxu0 0
        %365 = vmatprep.subr.bf16.mxu0 0
        %366 = vmatpush1.bf16.msra.mxu0 0
        %367 = vmatprep.subr.bf16.mxu0 0
        %368 = vmatpush1.bf16.msra.mxu0 0
        %369 = vmatprep.subr.bf16.mxu0 0
        %370 = vmatpush1.bf16.msra.mxu0 0
        %371 = vmatprep.subr.bf16.mxu0 0
        %372 = vmatpush1.bf16.msra.mxu0 0
        %373 = vmatprep.subr.bf16.mxu0 0
        %374 = vmatpush1.bf16.msra.mxu0 0
        %375 = vmatprep.mubr.bf16.mxu0 0
        %376 = vmatmul.mubr.bf16.gmra.mrb[0].mxu0 %v341
        %v377 = vpop.f32.mrb[0].mxu0
        %v378 = vadd.f32 0.0, %v377
        %v379 = vpop.f32.mrb[0].mxu0
        %v380 = vpop.f32.mrb[0].mxu0
        %v381 = vadd.f32 0.0, %v380
        %v382 = vpop.f32.mrb[0].mxu0
        %383 = vdwg.mxu0
        %v384 = vadd.f32 %v300, %v378
        %v385 = vadd.f32 %v300, %v381
        %s386 = scalar_lea.vmem [#allocation2], 32
        %v387 = vld [vmem:[%s386] sm:$0xf]
        %v388 = vld [vmem:[%s386 + $0x4] sm:$0xf]
        %v389 = vld [vmem:[%s386 + $0x8] sm:$0xf]
        %v390 = vld [vmem:[%s386 + $0xc] sm:$0xf]
        %v391 = vld [vmem:[%s386 + $0x10] sm:$0xf]
        %v392 = vld [vmem:[%s386 + $0x14] sm:$0xf]
        %v393 = vld [vmem:[%s386 + $0x18] sm:$0xf]
        %v394 = vld [vmem:[%s386 + $0x1c] sm:$0xf]
        %v396 = vunpack.c.l.b16 %v294
        %v397 = vpack.c.b16 %v396, %v396
        %vm398 = vsmask.f32 7424
        %v399 = vshrl.u32 %v314, 16
        %v401 = vshll.u32 %v314, 16
        %v403 = vrot.slane %v401, 1
        %v404 = vor.u32 %v399, %v403
        %v406 = vshll.u32 %v397, 16
        %v408 = vrot.slane %v406, 1
        %v409 = vsel %vm398, %v404, %v408
        %v418 = vunpack.c.l.b16 %v387
        %v419 = vunpack.c.l.b16 %v388
        %v420 = vunpack.c.l.b16 %v389
        %v421 = vunpack.c.l.b16 %v390
        %v422 = vunpack.c.l.b16 %v391
        %v423 = vunpack.c.l.b16 %v392
        %v424 = vunpack.c.l.b16 %v393
        %v425 = vunpack.c.l.b16 %v394
        %v426 = vpack.c.b16 %v419, %v418
        %v427 = vpack.c.b16 %v421, %v420
        %v428 = vpack.c.b16 %v423, %v422
        %v429 = vpack.c.b16 %v425, %v424
        %v435 = vsel %vm339, %v409, 0
        %437 = vmatprep.subr.bf16.mxu0 0
        %438 = vmatpush1.bf16.msra.mxu0 %v426
        %439 = vmatprep.subr.bf16.mxu0 0
        %440 = vmatpush1.bf16.msra.mxu0 %v427
        %441 = vmatprep.subr.bf16.mxu0 0
        %442 = vmatpush1.bf16.msra.mxu0 %v428
        %443 = vmatprep.subr.bf16.mxu0 0
        %444 = vmatpush1.bf16.msra.mxu0 %v429
        %445 = vmatprep.subr.bf16.mxu0 0
        %446 = vmatpush1.bf16.msra.mxu0 0
        %447 = vmatprep.subr.bf16.mxu0 0
        %448 = vmatpush1.bf16.msra.mxu0 0
        %449 = vmatprep.subr.bf16.mxu0 0
        %450 = vmatpush1.bf16.msra.mxu0 0
        %451 = vmatprep.subr.bf16.mxu0 0
        %452 = vmatpush1.bf16.msra.mxu0 0
        %453 = vmatprep.subr.bf16.mxu0 0
        %454 = vmatpush1.bf16.msra.mxu0 0
        %455 = vmatprep.subr.bf16.mxu0 0
        %456 = vmatpush1.bf16.msra.mxu0 0
        %457 = vmatprep.subr.bf16.mxu0 0
        %458 = vmatpush1.bf16.msra.mxu0 0
        %459 = vmatprep.subr.bf16.mxu0 0
        %460 = vmatpush1.bf16.msra.mxu0 0
        %461 = vmatprep.subr.bf16.mxu0 0
        %462 = vmatpush1.bf16.msra.mxu0 0
        %463 = vmatprep.subr.bf16.mxu0 0
        %464 = vmatpush1.bf16.msra.mxu0 0
        %465 = vmatprep.subr.bf16.mxu0 0
        %466 = vmatpush1.bf16.msra.mxu0 0
        %467 = vmatprep.subr.bf16.mxu0 0
        %468 = vmatpush1.bf16.msra.mxu0 0
        %469 = vmatprep.mubr.bf16.mxu0 0
        %470 = vmatmul.mubr.bf16.gmra.mrb[0].mxu0 %v435
        %v471 = vpop.f32.mrb[0].mxu0
        %v472 = vadd.f32 0.0, %v471
        %v473 = vpop.f32.mrb[0].mxu0
        %v474 = vpop.f32.mrb[0].mxu0
        %v475 = vadd.f32 0.0, %v474
        %v476 = vpop.f32.mrb[0].mxu0
        %477 = vdwg.mxu0
        %v478 = vadd.f32 %v384, %v472
        %v479 = vadd.f32 %v385, %v475
        %s480 = scalar_lea.vmem [#allocation2], 64
        %v481 = vld [vmem:[%s480] sm:$0xf]
        %v482 = vld [vmem:[%s480 + $0x4] sm:$0xf]
        %v483 = vld [vmem:[%s480 + $0x8] sm:$0xf]
        %v484 = vld [vmem:[%s480 + $0xc] sm:$0xf]
        %v485 = vld [vmem:[%s480 + $0x10] sm:$0xf]
        %v486 = vld [vmem:[%s480 + $0x14] sm:$0xf]
        %v487 = vld [vmem:[%s480 + $0x18] sm:$0xf]
        %v488 = vld [vmem:[%s480 + $0x1c] sm:$0xf]
        %vm489 = vcmask 1046528
        %v490 = vrot.slane %v314, 1
        %v491 = vrot.slane %v397, 1
        %v492 = vsel %vm489, %v490, %v491
        %v501 = vunpack.c.l.b16 %v481
        %v502 = vunpack.c.l.b16 %v482
        %v503 = vunpack.c.l.b16 %v483
        %v504 = vunpack.c.l.b16 %v484
        %v505 = vunpack.c.l.b16 %v485
        %v506 = vunpack.c.l.b16 %v486
        %v507 = vunpack.c.l.b16 %v487
        %v508 = vunpack.c.l.b16 %v488
        %v509 = vpack.c.b16 %v502, %v501
        %v510 = vpack.c.b16 %v504, %v503
        %v511 = vpack.c.b16 %v506, %v505
        %v512 = vpack.c.b16 %v508, %v507
        %v518 = vsel %vm339, %v492, 0
        %520 = vmatprep.subr.bf16.mxu0 0
        %521 = vmatpush1.bf16.msra.mxu0 %v509
        %522 = vmatprep.subr.bf16.mxu0 0
        %523 = vmatpush1.bf16.msra.mxu0 %v510
        %524 = vmatprep.subr.bf16.mxu0 0
        %525 = vmatpush1.bf16.msra.mxu0 %v511
        %526 = vmatprep.subr.bf16.mxu0 0
        %527 = vmatpush1.bf16.msra.mxu0 %v512
        %528 = vmatprep.subr.bf16.mxu0 0
        %529 = vmatpush1.bf16.msra.mxu0 0
        %530 = vmatprep.subr.bf16.mxu0 0
        %531 = vmatpush1.bf16.msra.mxu0 0
        %532 = vmatprep.subr.bf16.mxu0 0
        %533 = vmatpush1.bf16.msra.mxu0 0
        %534 = vmatprep.subr.bf16.mxu0 0
        %535 = vmatpush1.bf16.msra.mxu0 0
        %536 = vmatprep.subr.bf16.mxu0 0
        %537 = vmatpush1.bf16.msra.mxu0 0
        %538 = vmatprep.subr.bf16.mxu0 0
        %539 = vmatpush1.bf16.msra.mxu0 0
        %540 = vmatprep.subr.bf16.mxu0 0
        %541 = vmatpush1.bf16.msra.mxu0 0
        %542 = vmatprep.subr.bf16.mxu0 0
        %543 = vmatpush1.bf16.msra.mxu0 0
        %544 = vmatprep.subr.bf16.mxu0 0
        %545 = vmatpush1.bf16.msra.mxu0 0
        %546 = vmatprep.subr.bf16.mxu0 0
        %547 = vmatpush1.bf16.msra.mxu0 0
        %548 = vmatprep.subr.bf16.mxu0 0
        %549 = vmatpush1.bf16.msra.mxu0 0
        %550 = vmatprep.subr.bf16.mxu0 0
        %551 = vmatpush1.bf16.msra.mxu0 0
        %552 = vmatprep.mubr.bf16.mxu0 0
        %553 = vmatmul.mubr.bf16.gmra.mrb[0].mxu0 %v518
        %v554 = vpop.f32.mrb[0].mxu0
        %v555 = vadd.f32 0.0, %v554
        %v556 = vpop.f32.mrb[0].mxu0
        %v557 = vpop.f32.mrb[0].mxu0
        %v558 = vadd.f32 0.0, %v557
        %v559 = vpop.f32.mrb[0].mxu0
        %560 = vdwg.mxu0
        %v561 = vadd.f32 %v478, %v555
        %v562 = vadd.f32 %v479, %v558
        %v563 = vmax.f32 %v561, 0.0
        %v564 = vmax.f32 %v562, 0.0
        %vm567 = vcmask 1040384
        %v568 = vrot.slane %v563, 7
        %v569 = vrot.slane %v564, 7
        %v570 = vsel %vm567, %v568, %v569
        %v574 = vsel %vm567, 0.0, %v568
        %v575 = vsel %vm567, %v569, 0.0
        %v576 = vpack.c.bf16 %v570, %v574
        %v577 = vpack.c.bf16 %v575, %v575
        %v578 = vld [vmem:[%s4] sm:$0x1]
        %v580 = vlaneseq
        %v581 = vshrl.u32 %v580, 7
        %v582 = vsub.s32 0, %v581
        %v583 = vrot.slane %v578, %v582
        %v585 = vld [vmem:[#allocation5] sm:$0xf]
        %v586 = vld [vmem:[#allocation5 + $0x4] sm:$0xf]
        %v587 = vld [vmem:[#allocation5 + $0x8] sm:$0xf]
        %v588 = vld [vmem:[#allocation5 + $0xc] sm:$0xf]
        %v589 = vld [vmem:[#allocation5 + $0x10] sm:$0xf]
        %v590 = vld [vmem:[#allocation5 + $0x14] sm:$0xf]
        %v591 = vld [vmem:[#allocation5 + $0x18] sm:$0xf]
        %v592 = vld [vmem:[#allocation5 + $0x1c] sm:$0xf]
        %v593 = vld [vmem:[#allocation5 + $0x20] sm:$0xf]
        %v594 = vld [vmem:[#allocation5 + $0x24] sm:$0xf]
        %v595 = vld [vmem:[#allocation5 + $0x28] sm:$0xf]
        %v596 = vld [vmem:[#allocation5 + $0x2c] sm:$0xf]
        %v597 = vld [vmem:[#allocation5 + $0x30] sm:$0xf]
        %v598 = vld [vmem:[#allocation5 + $0x34] sm:$0xf]
        %v599 = vld [vmem:[#allocation5 + $0x38] sm:$0xf]
        %v600 = vld [vmem:[#allocation5 + $0x3c] sm:$0xf]
        %v617 = vunpack.c.l.b16 %v585
        %v618 = vunpack.c.l.b16 %v586
        %v619 = vunpack.c.l.b16 %v587
        %v620 = vunpack.c.l.b16 %v588
        %v621 = vunpack.c.l.b16 %v589
        %v622 = vunpack.c.l.b16 %v590
        %v623 = vunpack.c.l.b16 %v591
        %v624 = vunpack.c.l.b16 %v592
        %v625 = vunpack.c.l.b16 %v593
        %v626 = vunpack.c.l.b16 %v594
        %v627 = vunpack.c.l.b16 %v595
        %v628 = vunpack.c.l.b16 %v596
        %v629 = vunpack.c.l.b16 %v597
        %v630 = vunpack.c.l.b16 %v598
        %v631 = vunpack.c.l.b16 %v599
        %v632 = vunpack.c.l.b16 %v600
        %v633 = vpack.c.b16 %v618, %v617
        %v634 = vpack.c.b16 %v620, %v619
        %v635 = vpack.c.b16 %v622, %v621
        %v636 = vpack.c.b16 %v624, %v623
        %v637 = vpack.c.b16 %v626, %v625
        %v638 = vpack.c.b16 %v628, %v627
        %v639 = vpack.c.b16 %v630, %v629
        %v640 = vpack.c.b16 %v632, %v631
        %649 = vmatprep.subr.bf16.mxu0 0
        %650 = vmatpush1.bf16.msra.mxu0 %v633
        %651 = vmatprep.subr.bf16.mxu0 0
        %652 = vmatpush1.bf16.msra.mxu0 %v634
        %653 = vmatprep.subr.bf16.mxu0 0
        %654 = vmatpush1.bf16.msra.mxu0 %v635
        %655 = vmatprep.subr.bf16.mxu0 0
        %656 = vmatpush1.bf16.msra.mxu0 %v636
        %657 = vmatprep.subr.bf16.mxu0 0
        %658 = vmatpush1.bf16.msra.mxu0 %v637
        %659 = vmatprep.subr.bf16.mxu0 0
        %660 = vmatpush1.bf16.msra.mxu0 %v638
        %661 = vmatprep.subr.bf16.mxu0 0
        %662 = vmatpush1.bf16.msra.mxu0 %v639
        %663 = vmatprep.subr.bf16.mxu0 0
        %664 = vmatpush1.bf16.msra.mxu0 %v640
        %665 = vmatprep.subr.bf16.mxu0 0
        %666 = vmatpush1.bf16.msra.mxu0 0
        %667 = vmatprep.subr.bf16.mxu0 0
        %668 = vmatpush1.bf16.msra.mxu0 0
        %669 = vmatprep.subr.bf16.mxu0 0
        %670 = vmatpush1.bf16.msra.mxu0 0
        %671 = vmatprep.subr.bf16.mxu0 0
        %672 = vmatpush1.bf16.msra.mxu0 0
        %673 = vmatprep.subr.bf16.mxu0 0
        %674 = vmatpush1.bf16.msra.mxu0 0
        %675 = vmatprep.subr.bf16.mxu0 0
        %676 = vmatpush1.bf16.msra.mxu0 0
        %677 = vmatprep.subr.bf16.mxu0 0
        %678 = vmatpush1.bf16.msra.mxu0 0
        %679 = vmatprep.subr.bf16.mxu0 0
        %680 = vmatpush1.bf16.msra.mxu0 0
        %681 = vmatprep.mubr.bf16.mxu0 0
        %682 = vmatmul.mubr.bf16.gmra.mrb[0].mxu0 %v576
        %v683 = vpop.f32.mrb[0].mxu0
        %v684 = vadd.f32 0.0, %v683
        %v685 = vpop.f32.mrb[0].mxu0
        %v686 = vpop.f32.mrb[0].mxu0
        %v687 = vadd.f32 0.0, %v686
        %v688 = vpop.f32.mrb[0].mxu0
        %689 = vdwg.mxu0
        %v690 = vadd.f32 %v583, %v684
        %v691 = vadd.f32 %v583, %v687
        %s692 = scalar_lea.vmem [#allocation5], 64
        %v693 = vld [vmem:[%s692] sm:$0xf]
        %v694 = vld [vmem:[%s692 + $0x4] sm:$0xf]
        %v695 = vld [vmem:[%s692 + $0x8] sm:$0xf]
        %v696 = vld [vmem:[%s692 + $0xc] sm:$0xf]
        %v697 = vld [vmem:[%s692 + $0x10] sm:$0xf]
        %v698 = vld [vmem:[%s692 + $0x14] sm:$0xf]
        %v699 = vld [vmem:[%s692 + $0x18] sm:$0xf]
        %v700 = vld [vmem:[%s692 + $0x1c] sm:$0xf]
        %v701 = vld [vmem:[%s692 + $0x20] sm:$0xf]
        %v702 = vld [vmem:[%s692 + $0x24] sm:$0xf]
        %v703 = vld [vmem:[%s692 + $0x28] sm:$0xf]
        %v704 = vld [vmem:[%s692 + $0x2c] sm:$0xf]
        %v705 = vld [vmem:[%s692 + $0x30] sm:$0xf]
        %v706 = vld [vmem:[%s692 + $0x34] sm:$0xf]
        %v707 = vld [vmem:[%s692 + $0x38] sm:$0xf]
        %v708 = vld [vmem:[%s692 + $0x3c] sm:$0xf]
        %v710 = vshrl.u32 %v576, 16
        %v712 = vshll.u32 %v576, 16
        %v714 = vrot.slane %v712, 1
        %v715 = vor.u32 %v710, %v714
        %v717 = vshll.u32 %v577, 16
        %v719 = vrot.slane %v717, 1
        %v720 = vsel %vm398, %v715, %v719
        %v738 = vunpack.c.l.b16 %v693
        %v739 = vunpack.c.l.b16 %v694
        %v740 = vunpack.c.l.b16 %v695
        %v741 = vunpack.c.l.b16 %v696
        %v742 = vunpack.c.l.b16 %v697
        %v743 = vunpack.c.l.b16 %v698
        %v744 = vunpack.c.l.b16 %v699
        %v745 = vunpack.c.l.b16 %v700
        %v746 = vunpack.c.l.b16 %v701
        %v747 = vunpack.c.l.b16 %v702
        %v748 = vunpack.c.l.b16 %v703
        %v749 = vunpack.c.l.b16 %v704
        %v750 = vunpack.c.l.b16 %v705
        %v751 = vunpack.c.l.b16 %v706
        %v752 = vunpack.c.l.b16 %v707
        %v753 = vunpack.c.l.b16 %v708
        %v754 = vpack.c.b16 %v739, %v738
        %v755 = vpack.c.b16 %v741, %v740
        %v756 = vpack.c.b16 %v743, %v742
        %v757 = vpack.c.b16 %v745, %v744
        %v758 = vpack.c.b16 %v747, %v746
        %v759 = vpack.c.b16 %v749, %v748
        %v760 = vpack.c.b16 %v751, %v750
        %v761 = vpack.c.b16 %v753, %v752
        %770 = vmatprep.subr.bf16.mxu0 0
        %771 = vmatpush1.bf16.msra.mxu0 %v754
        %772 = vmatprep.subr.bf16.mxu0 0
        %773 = vmatpush1.bf16.msra.mxu0 %v755
        %774 = vmatprep.subr.bf16.mxu0 0
        %775 = vmatpush1.bf16.msra.mxu0 %v756
        %776 = vmatprep.subr.bf16.mxu0 0
        %777 = vmatpush1.bf16.msra.mxu0 %v757
        %778 = vmatprep.subr.bf16.mxu0 0
        %779 = vmatpush1.bf16.msra.mxu0 %v758
        %780 = vmatprep.subr.bf16.mxu0 0
        %781 = vmatpush1.bf16.msra.mxu0 %v759
        %782 = vmatprep.subr.bf16.mxu0 0
        %783 = vmatpush1.bf16.msra.mxu0 %v760
        %784 = vmatprep.subr.bf16.mxu0 0
        %785 = vmatpush1.bf16.msra.mxu0 %v761
        %786 = vmatprep.subr.bf16.mxu0 0
        %787 = vmatpush1.bf16.msra.mxu0 0
        %788 = vmatprep.subr.bf16.mxu0 0
        %789 = vmatpush1.bf16.msra.mxu0 0
        %790 = vmatprep.subr.bf16.mxu0 0
        %791 = vmatpush1.bf16.msra.mxu0 0
        %792 = vmatprep.subr.bf16.mxu0 0
        %793 = vmatpush1.bf16.msra.mxu0 0
        %794 = vmatprep.subr.bf16.mxu0 0
        %795 = vmatpush1.bf16.msra.mxu0 0
        %796 = vmatprep.subr.bf16.mxu0 0
        %797 = vmatpush1.bf16.msra.mxu0 0
        %798 = vmatprep.subr.bf16.mxu0 0
        %799 = vmatpush1.bf16.msra.mxu0 0
        %800 = vmatprep.subr.bf16.mxu0 0
        %801 = vmatpush1.bf16.msra.mxu0 0
        %802 = vmatprep.mubr.bf16.mxu0 0
        %803 = vmatmul.mubr.bf16.gmra.mrb[0].mxu0 %v720
        %v804 = vpop.f32.mrb[0].mxu0
        %v805 = vadd.f32 0.0, %v804
        %v806 = vpop.f32.mrb[0].mxu0
        %v807 = vpop.f32.mrb[0].mxu0
        %v808 = vadd.f32 0.0, %v807
        %v809 = vpop.f32.mrb[0].mxu0
        %810 = vdwg.mxu0
        %v811 = vadd.f32 %v690, %v805
        %v812 = vadd.f32 %v691, %v808
        %s813 = scalar_lea.vmem [#allocation5], 128
        %v814 = vld [vmem:[%s813] sm:$0xf]
        %v815 = vld [vmem:[%s813 + $0x4] sm:$0xf]
        %v816 = vld [vmem:[%s813 + $0x8] sm:$0xf]
        %v817 = vld [vmem:[%s813 + $0xc] sm:$0xf]
        %v818 = vld [vmem:[%s813 + $0x10] sm:$0xf]
        %v819 = vld [vmem:[%s813 + $0x14] sm:$0xf]
        %v820 = vld [vmem:[%s813 + $0x18] sm:$0xf]
        %v821 = vld [vmem:[%s813 + $0x1c] sm:$0xf]
        %v822 = vld [vmem:[%s813 + $0x20] sm:$0xf]
        %v823 = vld [vmem:[%s813 + $0x24] sm:$0xf]
        %v824 = vld [vmem:[%s813 + $0x28] sm:$0xf]
        %v825 = vld [vmem:[%s813 + $0x2c] sm:$0xf]
        %v826 = vld [vmem:[%s813 + $0x30] sm:$0xf]
        %v827 = vld [vmem:[%s813 + $0x34] sm:$0xf]
        %v828 = vld [vmem:[%s813 + $0x38] sm:$0xf]
        %v829 = vld [vmem:[%s813 + $0x3c] sm:$0xf]
        %v832 = vrot.slane %v576, 1
        %v833 = vrot.slane %v577, 1
        %v834 = vsel %vm489, %v832, %v833
        %v852 = vunpack.c.l.b16 %v814
        %v853 = vunpack.c.l.b16 %v815
        %v854 = vunpack.c.l.b16 %v816
        %v855 = vunpack.c.l.b16 %v817
        %v856 = vunpack.c.l.b16 %v818
        %v857 = vunpack.c.l.b16 %v819
        %v858 = vunpack.c.l.b16 %v820
        %v859 = vunpack.c.l.b16 %v821
        %v860 = vunpack.c.l.b16 %v822
        %v861 = vunpack.c.l.b16 %v823
        %v862 = vunpack.c.l.b16 %v824
        %v863 = vunpack.c.l.b16 %v825
        %v864 = vunpack.c.l.b16 %v826
        %v865 = vunpack.c.l.b16 %v827
        %v866 = vunpack.c.l.b16 %v828
        %v867 = vunpack.c.l.b16 %v829
        %v868 = vpack.c.b16 %v853, %v852
        %v869 = vpack.c.b16 %v855, %v854
        %v870 = vpack.c.b16 %v857, %v856
        %v871 = vpack.c.b16 %v859, %v858
        %v872 = vpack.c.b16 %v861, %v860
        %v873 = vpack.c.b16 %v863, %v862
        %v874 = vpack.c.b16 %v865, %v864
        %v875 = vpack.c.b16 %v867, %v866
        %884 = vmatprep.subr.bf16.mxu0 0
        %885 = vmatpush1.bf16.msra.mxu0 %v868
        %886 = vmatprep.subr.bf16.mxu0 0
        %887 = vmatpush1.bf16.msra.mxu0 %v869
        %888 = vmatprep.subr.bf16.mxu0 0
        %889 = vmatpush1.bf16.msra.mxu0 %v870
        %890 = vmatprep.subr.bf16.mxu0 0
        %891 = vmatpush1.bf16.msra.mxu0 %v871
        %892 = vmatprep.subr.bf16.mxu0 0
        %893 = vmatpush1.bf16.msra.mxu0 %v872
        %894 = vmatprep.subr.bf16.mxu0 0
        %895 = vmatpush1.bf16.msra.mxu0 %v873
        %896 = vmatprep.subr.bf16.mxu0 0
        %897 = vmatpush1.bf16.msra.mxu0 %v874
        %898 = vmatprep.subr.bf16.mxu0 0
        %899 = vmatpush1.bf16.msra.mxu0 %v875
        %900 = vmatprep.subr.bf16.mxu0 0
        %901 = vmatpush1.bf16.msra.mxu0 0
        %902 = vmatprep.subr.bf16.mxu0 0
        %903 = vmatpush1.bf16.msra.mxu0 0
        %904 = vmatprep.subr.bf16.mxu0 0
        %905 = vmatpush1.bf16.msra.mxu0 0
        %906 = vmatprep.subr.bf16.mxu0 0
        %907 = vmatpush1.bf16.msra.mxu0 0
        %908 = vmatprep.subr.bf16.mxu0 0
        %909 = vmatpush1.bf16.msra.mxu0 0
        %910 = vmatprep.subr.bf16.mxu0 0
        %911 = vmatpush1.bf16.msra.mxu0 0
        %912 = vmatprep.subr.bf16.mxu0 0
        %913 = vmatpush1.bf16.msra.mxu0 0
        %914 = vmatprep.subr.bf16.mxu0 0
        %915 = vmatpush1.bf16.msra.mxu0 0
        %916 = vmatprep.mubr.bf16.mxu0 0
        %917 = vmatmul.mubr.bf16.gmra.mrb[0].mxu0 %v834
        %v918 = vpop.f32.mrb[0].mxu0
        %v919 = vadd.f32 0.0, %v918
        %v920 = vpop.f32.mrb[0].mxu0
        %v921 = vpop.f32.mrb[0].mxu0
        %v922 = vadd.f32 0.0, %v921
        %v923 = vpop.f32.mrb[0].mxu0
        %924 = vdwg.mxu0
        %v925 = vadd.f32 %v811, %v919
        %v926 = vadd.f32 %v812, %v922
        %v927 = vmax.f32 %v925, 0.0
        %v928 = vmax.f32 %v926, 0.0
        %929 = vst [vmem:[%s278] sm:$0xff] %v927
        %930 = vst [vmem:[%s278 + $0x8] sm:$0xff] %v928
        %v933 = vcombine.high %v927, %v927
        %v935 = vunpack.c.l.s4 1983009808
        %v936 = vunpack.c.0.s8 %v935
        %v937 = vlaneseq
        %v938 = vshrl.u32 %v937, 7
        %v939 = vsub.s32 %v936, %v938
        %v940 = vrot.slane %v927, %v939
        %v942 = vunpack.c.l.s4 1983009808
        %v943 = vunpack.c.0.s8 %v942
        %v944 = vlaneseq
        %v945 = vshrl.u32 %v944, 7
        %v946 = vsub.s32 %v943, %v945
        %v947 = vrot.slane %v933, %v946
        %v948 = vcombine.high %v940, %v940
        %v949 = vcombine.high %v947, %v947
        %v950 = vcombine.high %v928, %v928
        %v952 = vunpack.c.l.s4 1983009808
        %v953 = vunpack.c.0.s8 %v952
        %v954 = vlaneseq
        %v955 = vshrl.u32 %v954, 7
        %v956 = vsub.s32 %v953, %v955
        %v957 = vrot.slane %v928, %v956
        %v959 = vunpack.c.l.s4 1983009808
        %v960 = vunpack.c.0.s8 %v959
        %v961 = vlaneseq
        %v962 = vshrl.u32 %v961, 7
        %v963 = vsub.s32 %v960, %v962
        %v964 = vrot.slane %v950, %v963
        %v965 = vcombine.high %v957, %v957
        %v966 = vcombine.high %v964, %v964
        %vm975 = vcmask 1041408
        %v976 = vsel %vm975, %v940, -inf
        %v977 = vrot.slane %v976, 4
        %v978 = vmax.f32 %v976, %v977
        %v979 = vrot.slane %v978, 2
        %v980 = vmax.f32 %v978, %v979
        %v981 = vrot.slane %v980, 1
        %v982 = vmax.f32 %v980, %v981
        %v983 = vsel %vm975, %v948, -inf
        %v984 = vrot.slane %v983, 4
        %v985 = vmax.f32 %v983, %v984
        %v986 = vrot.slane %v985, 2
        %v987 = vmax.f32 %v985, %v986
        %v988 = vrot.slane %v987, 1
        %v989 = vmax.f32 %v987, %v988
        %v990 = vsel %vm975, %v947, -inf
        %v991 = vrot.slane %v990, 4
        %v992 = vmax.f32 %v990, %v991
        %v993 = vrot.slane %v992, 2
        %v994 = vmax.f32 %v992, %v993
        %v995 = vrot.slane %v994, 1
        %v996 = vmax.f32 %v994, %v995
        %v997 = vsel %vm975, %v949, -inf
        %v998 = vrot.slane %v997, 4
        %v999 = vmax.f32 %v997, %v998
        %v1000 = vrot.slane %v999, 2
        %v1001 = vmax.f32 %v999, %v1000
        %v1002 = vrot.slane %v1001, 1
        %v1003 = vmax.f32 %v1001, %v1002
        %v1004 = vsel %vm975, %v957, -inf
        %v1005 = vrot.slane %v1004, 4
        %v1006 = vmax.f32 %v1004, %v1005
        %v1007 = vrot.slane %v1006, 2
        %v1008 = vmax.f32 %v1006, %v1007
        %v1009 = vrot.slane %v1008, 1
        %v1010 = vmax.f32 %v1008, %v1009
        %v1011 = vsel %vm975, %v965, -inf
        %v1012 = vrot.slane %v1011, 4
        %v1013 = vmax.f32 %v1011, %v1012
        %v1014 = vrot.slane %v1013, 2
        %v1015 = vmax.f32 %v1013, %v1014
        %v1016 = vrot.slane %v1015, 1
        %v1017 = vmax.f32 %v1015, %v1016
        %v1018 = vsel %vm975, %v964, -inf
        %v1019 = vrot.slane %v1018, 4
        %v1020 = vmax.f32 %v1018, %v1019
        %v1021 = vrot.slane %v1020, 2
        %v1022 = vmax.f32 %v1020, %v1021
        %v1023 = vrot.slane %v1022, 1
        %v1024 = vmax.f32 %v1022, %v1023
        %v1025 = vsel %vm975, %v966, -inf
        %v1026 = vrot.slane %v1025, 4
        %v1027 = vmax.f32 %v1025, %v1026
        %v1028 = vrot.slane %v1027, 2
        %v1029 = vmax.f32 %v1027, %v1028
        %v1030 = vrot.slane %v1029, 1
        %v1031 = vmax.f32 %v1029, %v1030
        %1040 = vrot.lane.b32.xlu0 %v982, 112
        %v1041 = vpop.permute.xlu0 %1040
        %1042 = vrot.lane.b32.xlu0 %v989, 112
        %v1043 = vpop.permute.xlu0 %1042
        %1044 = vrot.lane.b32.xlu0 %v996, 112
        %v1045 = vpop.permute.xlu0 %1044
        %1046 = vrot.lane.b32.xlu0 %v1003, 112
        %v1047 = vpop.permute.xlu0 %1046
        %1048 = vrot.lane.b32.xlu0 %v1010, 112
        %v1049 = vpop.permute.xlu0 %1048
        %1050 = vrot.lane.b32.xlu0 %v1017, 112
        %v1051 = vpop.permute.xlu0 %1050
        %1052 = vrot.lane.b32.xlu0 %v1024, 112
        %v1053 = vpop.permute.xlu0 %1052
        %1054 = vrot.lane.b32.xlu0 %v1031, 112
        %v1055 = vpop.permute.xlu0 %1054
        %1056 = vrot.lane.b32.xlu0 %v982, 96
        %v1057 = vpop.permute.xlu0 %1056
        %1058 = vrot.lane.b32.xlu0 %v989, 96
        %v1059 = vpop.permute.xlu0 %1058
        %1060 = vrot.lane.b32.xlu0 %v996, 96
        %v1061 = vpop.permute.xlu0 %1060
        %1062 = vrot.lane.b32.xlu0 %v1003, 96
        %v1063 = vpop.permute.xlu0 %1062
        %1064 = vrot.lane.b32.xlu0 %v1010, 96
        %v1065 = vpop.permute.xlu0 %1064
        %1066 = vrot.lane.b32.xlu0 %v1017, 96
        %v1067 = vpop.permute.xlu0 %1066
        %1068 = vrot.lane.b32.xlu0 %v1024, 96
        %v1069 = vpop.permute.xlu0 %1068
        %1070 = vrot.lane.b32.xlu0 %v1031, 96
        %v1071 = vpop.permute.xlu0 %1070
        %1072 = vrot.lane.b32.xlu0 %v982, 80
        %v1073 = vpop.permute.xlu0 %1072
        %1074 = vrot.lane.b32.xlu0 %v989, 80
        %v1075 = vpop.permute.xlu0 %1074
        %1076 = vrot.lane.b32.xlu0 %v996, 80
        %v1077 = vpop.permute.xlu0 %1076
        %1078 = vrot.lane.b32.xlu0 %v1003, 80
        %v1079 = vpop.permute.xlu0 %1078
        %1080 = vrot.lane.b32.xlu0 %v1010, 80
        %v1081 = vpop.permute.xlu0 %1080
        %1082 = vrot.lane.b32.xlu0 %v1017, 80
        %v1083 = vpop.permute.xlu0 %1082
        %1084 = vrot.lane.b32.xlu0 %v1024, 80
        %v1085 = vpop.permute.xlu0 %1084
        %1086 = vrot.lane.b32.xlu0 %v1031, 80
        %v1087 = vpop.permute.xlu0 %1086
        %1088 = vrot.lane.b32.xlu0 %v982, 64
        %v1089 = vpop.permute.xlu0 %1088
        %1090 = vrot.lane.b32.xlu0 %v989, 64
        %v1091 = vpop.permute.xlu0 %1090
        %1092 = vrot.lane.b32.xlu0 %v996, 64
        %v1093 = vpop.permute.xlu0 %1092
        %1094 = vrot.lane.b32.xlu0 %v1003, 64
        %v1095 = vpop.permute.xlu0 %1094
        %1096 = vrot.lane.b32.xlu0 %v1010, 64
        %v1097 = vpop.permute.xlu0 %1096
        %1098 = vrot.lane.b32.xlu0 %v1017, 64
        %v1099 = vpop.permute.xlu0 %1098
        %1100 = vrot.lane.b32.xlu0 %v1024, 64
        %v1101 = vpop.permute.xlu0 %1100
        %1102 = vrot.lane.b32.xlu0 %v1031, 64
        %v1103 = vpop.permute.xlu0 %1102
        %1104 = vrot.lane.b32.xlu0 %v982, 48
        %v1105 = vpop.permute.xlu0 %1104
        %1106 = vrot.lane.b32.xlu0 %v989, 48
        %v1107 = vpop.permute.xlu0 %1106
        %1108 = vrot.lane.b32.xlu0 %v996, 48
        %v1109 = vpop.permute.xlu0 %1108
        %1110 = vrot.lane.b32.xlu0 %v1003, 48
        %v1111 = vpop.permute.xlu0 %1110
        %1112 = vrot.lane.b32.xlu0 %v1010, 48
        %v1113 = vpop.permute.xlu0 %1112
        %1114 = vrot.lane.b32.xlu0 %v1017, 48
        %v1115 = vpop.permute.xlu0 %1114
        %1116 = vrot.lane.b32.xlu0 %v1024, 48
        %v1117 = vpop.permute.xlu0 %1116
        %1118 = vrot.lane.b32.xlu0 %v1031, 48
        %v1119 = vpop.permute.xlu0 %1118
        %1120 = vrot.lane.b32.xlu0 %v982, 32
        %v1121 = vpop.permute.xlu0 %1120
        %1122 = vrot.lane.b32.xlu0 %v989, 32
        %v1123 = vpop.permute.xlu0 %1122
        %1124 = vrot.lane.b32.xlu0 %v996, 32
        %v1125 = vpop.permute.xlu0 %1124
        %1126 = vrot.lane.b32.xlu0 %v1003, 32
        %v1127 = vpop.permute.xlu0 %1126
        %1128 = vrot.lane.b32.xlu0 %v1010, 32
        %v1129 = vpop.permute.xlu0 %1128
        %1130 = vrot.lane.b32.xlu0 %v1017, 32
        %v1131 = vpop.permute.xlu0 %1130
        %1132 = vrot.lane.b32.xlu0 %v1024, 32
        %v1133 = vpop.permute.xlu0 %1132
        %1134 = vrot.lane.b32.xlu0 %v1031, 32
        %v1135 = vpop.permute.xlu0 %1134
        %1136 = vrot.lane.b32.xlu0 %v982, 16
        %v1137 = vpop.permute.xlu0 %1136
        %1138 = vrot.lane.b32.xlu0 %v989, 16
        %v1139 = vpop.permute.xlu0 %1138
        %1140 = vrot.lane.b32.xlu0 %v996, 16
        %v1141 = vpop.permute.xlu0 %1140
        %1142 = vrot.lane.b32.xlu0 %v1003, 16
        %v1143 = vpop.permute.xlu0 %1142
        %1144 = vrot.lane.b32.xlu0 %v1010, 16
        %v1145 = vpop.permute.xlu0 %1144
        %1146 = vrot.lane.b32.xlu0 %v1017, 16
        %v1147 = vpop.permute.xlu0 %1146
        %1148 = vrot.lane.b32.xlu0 %v1024, 16
        %v1149 = vpop.permute.xlu0 %1148
        %1150 = vrot.lane.b32.xlu0 %v1031, 16
        %v1151 = vpop.permute.xlu0 %1150
        %v1152 = vrot.slane %v989, 7
        %vm1153 = vcmask 1041409
        %v1154 = vsel %vm1153, %v1152, %v982
        %v1155 = vrot.slane %v996, 6
        %vm1156 = vcmask 1042434
        %v1157 = vsel %vm1156, %v1155, %v1154
        %v1158 = vrot.slane %v1003, 5
        %vm1159 = vcmask 1043459
        %v1160 = vsel %vm1159, %v1158, %v1157
        %v1161 = vrot.slane %v1010, 4
        %vm1162 = vcmask 1044484
        %v1163 = vsel %vm1162, %v1161, %v1160
        %v1164 = vrot.slane %v1017, 3
        %vm1165 = vcmask 1045509
        %v1166 = vsel %vm1165, %v1164, %v1163
        %v1167 = vrot.slane %v1024, 2
        %vm1168 = vcmask 1046534
        %v1169 = vsel %vm1168, %v1167, %v1166
        %v1170 = vrot.slane %v1031, 1
        %vm1171 = vcmask 1047559
        %v1172 = vsel %vm1171, %v1170, %v1169
        %v1173 = vrot.slane %v1043, 7
        %v1174 = vsel %vm1153, %v1173, %v1041
        %v1175 = vrot.slane %v1045, 6
        %v1176 = vsel %vm1156, %v1175, %v1174
        %v1177 = vrot.slane %v1047, 5
        %v1178 = vsel %vm1159, %v1177, %v1176
        %v1179 = vrot.slane %v1049, 4
        %v1180 = vsel %vm1162, %v1179, %v1178
        %v1181 = vrot.slane %v1051, 3
        %v1182 = vsel %vm1165, %v1181, %v1180
        %v1183 = vrot.slane %v1053, 2
        %v1184 = vsel %vm1168, %v1183, %v1182
        %v1185 = vrot.slane %v1055, 1
        %v1186 = vsel %vm1171, %v1185, %v1184
        %v1187 = vrot.slane %v1059, 7
        %v1188 = vsel %vm1153, %v1187, %v1057
        %v1189 = vrot.slane %v1061, 6
        %v1190 = vsel %vm1156, %v1189, %v1188
        %v1191 = vrot.slane %v1063, 5
        %v1192 = vsel %vm1159, %v1191, %v1190
        %v1193 = vrot.slane %v1065, 4
        %v1194 = vsel %vm1162, %v1193, %v1192
        %v1195 = vrot.slane %v1067, 3
        %v1196 = vsel %vm1165, %v1195, %v1194
        %v1197 = vrot.slane %v1069, 2
        %v1198 = vsel %vm1168, %v1197, %v1196
        %v1199 = vrot.slane %v1071, 1
        %v1200 = vsel %vm1171, %v1199, %v1198
        %v1201 = vrot.slane %v1075, 7
        %v1202 = vsel %vm1153, %v1201, %v1073
        %v1203 = vrot.slane %v1077, 6
        %v1204 = vsel %vm1156, %v1203, %v1202
        %v1205 = vrot.slane %v1079, 5
        %v1206 = vsel %vm1159, %v1205, %v1204
        %v1207 = vrot.slane %v1081, 4
        %v1208 = vsel %vm1162, %v1207, %v1206
        %v1209 = vrot.slane %v1083, 3
        %v1210 = vsel %vm1165, %v1209, %v1208
        %v1211 = vrot.slane %v1085, 2
        %v1212 = vsel %vm1168, %v1211, %v1210
        %v1213 = vrot.slane %v1087, 1
        %v1214 = vsel %vm1171, %v1213, %v1212
        %v1215 = vrot.slane %v1091, 7
        %v1216 = vsel %vm1153, %v1215, %v1089
        %v1217 = vrot.slane %v1093, 6
        %v1218 = vsel %vm1156, %v1217, %v1216
        %v1219 = vrot.slane %v1095, 5
        %v1220 = vsel %vm1159, %v1219, %v1218
        %v1221 = vrot.slane %v1097, 4
        %v1222 = vsel %vm1162, %v1221, %v1220
        %v1223 = vrot.slane %v1099, 3
        %v1224 = vsel %vm1165, %v1223, %v1222
        %v1225 = vrot.slane %v1101, 2
        %v1226 = vsel %vm1168, %v1225, %v1224
        %v1227 = vrot.slane %v1103, 1
        %v1228 = vsel %vm1171, %v1227, %v1226
        %v1229 = vrot.slane %v1107, 7
        %v1230 = vsel %vm1153, %v1229, %v1105
        %v1231 = vrot.slane %v1109, 6
        %v1232 = vsel %vm1156, %v1231, %v1230
        %v1233 = vrot.slane %v1111, 5
        %v1234 = vsel %vm1159, %v1233, %v1232
        %v1235 = vrot.slane %v1113, 4
        %v1236 = vsel %vm1162, %v1235, %v1234
        %v1237 = vrot.slane %v1115, 3
        %v1238 = vsel %vm1165, %v1237, %v1236
        %v1239 = vrot.slane %v1117, 2
        %v1240 = vsel %vm1168, %v1239, %v1238
        %v1241 = vrot.slane %v1119, 1
        %v1242 = vsel %vm1171, %v1241, %v1240
        %v1243 = vrot.slane %v1123, 7
        %v1244 = vsel %vm1153, %v1243, %v1121
        %v1245 = vrot.slane %v1125, 6
        %v1246 = vsel %vm1156, %v1245, %v1244
        %v1247 = vrot.slane %v1127, 5
        %v1248 = vsel %vm1159, %v1247, %v1246
        %v1249 = vrot.slane %v1129, 4
        %v1250 = vsel %vm1162, %v1249, %v1248
        %v1251 = vrot.slane %v1131, 3
        %v1252 = vsel %vm1165, %v1251, %v1250
        %v1253 = vrot.slane %v1133, 2
        %v1254 = vsel %vm1168, %v1253, %v1252
        %v1255 = vrot.slane %v1135, 1
        %v1256 = vsel %vm1171, %v1255, %v1254
        %v1257 = vrot.slane %v1139, 7
        %v1258 = vsel %vm1153, %v1257, %v1137
        %v1259 = vrot.slane %v1141, 6
        %v1260 = vsel %vm1156, %v1259, %v1258
        %v1261 = vrot.slane %v1143, 5
        %v1262 = vsel %vm1159, %v1261, %v1260
        %v1263 = vrot.slane %v1145, 4
        %v1264 = vsel %vm1162, %v1263, %v1262
        %v1265 = vrot.slane %v1147, 3
        %v1266 = vsel %vm1165, %v1265, %v1264
        %v1267 = vrot.slane %v1149, 2
        %v1268 = vsel %vm1168, %v1267, %v1266
        %v1269 = vrot.slane %v1151, 1
        %v1270 = vsel %vm1171, %v1269, %v1268
        %v1279 = vcombine.low %v1172, %v1200
        %v1280 = vcombine.high %v1172, %v1200
        %v1282 = vunpack.c.l.s4 1983009808
        %v1283 = vunpack.c.0.s8 %v1282
        %v1284 = vlaneseq
        %v1285 = vshrl.u32 %v1284, 7
        %v1286 = vsub.s32 %v1283, %v1285
        %v1287 = vrot.slane %v1279, %v1286
        %v1289 = vunpack.c.l.s4 1983009808
        %v1290 = vunpack.c.0.s8 %v1289
        %v1291 = vlaneseq
        %v1292 = vshrl.u32 %v1291, 7
        %v1293 = vsub.s32 %v1290, %v1292
        %v1294 = vrot.slane %v1280, %v1293
        %v1295 = vcombine.low %v1186, %v1214
        %v1296 = vcombine.high %v1186, %v1214
        %v1298 = vunpack.c.l.s4 1983009808
        %v1299 = vunpack.c.0.s8 %v1298
        %v1300 = vlaneseq
        %v1301 = vshrl.u32 %v1300, 7
        %v1302 = vsub.s32 %v1299, %v1301
        %v1303 = vrot.slane %v1295, %v1302
        %v1305 = vunpack.c.l.s4 1983009808
        %v1306 = vunpack.c.0.s8 %v1305
        %v1307 = vlaneseq
        %v1308 = vshrl.u32 %v1307, 7
        %v1309 = vsub.s32 %v1306, %v1308
        %v1310 = vrot.slane %v1296, %v1309
        %v1311 = vcombine.low %v1228, %v1256
        %v1312 = vcombine.high %v1228, %v1256
        %v1314 = vunpack.c.l.s4 1983009808
        %v1315 = vunpack.c.0.s8 %v1314
        %v1316 = vlaneseq
        %v1317 = vshrl.u32 %v1316, 7
        %v1318 = vsub.s32 %v1315, %v1317
        %v1319 = vrot.slane %v1311, %v1318
        %v1321 = vunpack.c.l.s4 1983009808
        %v1322 = vunpack.c.0.s8 %v1321
        %v1323 = vlaneseq
        %v1324 = vshrl.u32 %v1323, 7
        %v1325 = vsub.s32 %v1322, %v1324
        %v1326 = vrot.slane %v1312, %v1325
        %v1327 = vcombine.low %v1242, %v1270
        %v1328 = vcombine.high %v1242, %v1270
        %v1330 = vunpack.c.l.s4 1983009808
        %v1331 = vunpack.c.0.s8 %v1330
        %v1332 = vlaneseq
        %v1333 = vshrl.u32 %v1332, 7
        %v1334 = vsub.s32 %v1331, %v1333
        %v1335 = vrot.slane %v1327, %v1334
        %v1337 = vunpack.c.l.s4 1983009808
        %v1338 = vunpack.c.0.s8 %v1337
        %v1339 = vlaneseq
        %v1340 = vshrl.u32 %v1339, 7
        %v1341 = vsub.s32 %v1338, %v1340
        %v1342 = vrot.slane %v1328, %v1341
        %v1343 = vcombine.low %v1287, %v1303
        %v1344 = vcombine.high %v1287, %v1303
        %v1346 = vunpack.c.l.s4 1934713408
        %v1347 = vunpack.c.0.s8 %v1346
        %v1348 = vlaneseq
        %v1349 = vshrl.u32 %v1348, 7
        %v1350 = vsub.s32 %v1347, %v1349
        %v1351 = vrot.slane %v1343, %v1350
        %v1353 = vunpack.c.l.s4 1934713408
        %v1354 = vunpack.c.0.s8 %v1353
        %v1355 = vlaneseq
        %v1356 = vshrl.u32 %v1355, 7
        %v1357 = vsub.s32 %v1354, %v1356
        %v1358 = vrot.slane %v1344, %v1357
        %v1359 = vcombine.low %v1294, %v1310
        %v1360 = vcombine.high %v1294, %v1310
        %v1362 = vunpack.c.l.s4 1934713408
        %v1363 = vunpack.c.0.s8 %v1362
        %v1364 = vlaneseq
        %v1365 = vshrl.u32 %v1364, 7
        %v1366 = vsub.s32 %v1363, %v1365
        %v1367 = vrot.slane %v1359, %v1366
        %v1369 = vunpack.c.l.s4 1934713408
        %v1370 = vunpack.c.0.s8 %v1369
        %v1371 = vlaneseq
        %v1372 = vshrl.u32 %v1371, 7
        %v1373 = vsub.s32 %v1370, %v1372
        %v1374 = vrot.slane %v1360, %v1373
        %v1375 = vcombine.low %v1319, %v1335
        %v1376 = vcombine.high %v1319, %v1335
        %v1378 = vunpack.c.l.s4 1934713408
        %v1379 = vunpack.c.0.s8 %v1378
        %v1380 = vlaneseq
        %v1381 = vshrl.u32 %v1380, 7
        %v1382 = vsub.s32 %v1379, %v1381
        %v1383 = vrot.slane %v1375, %v1382
        %v1385 = vunpack.c.l.s4 1934713408
        %v1386 = vunpack.c.0.s8 %v1385
        %v1387 = vlaneseq
        %v1388 = vshrl.u32 %v1387, 7
        %v1389 = vsub.s32 %v1386, %v1388
        %v1390 = vrot.slane %v1376, %v1389
        %v1391 = vcombine.low %v1326, %v1342
        %v1392 = vcombine.high %v1326, %v1342
        %v1394 = vunpack.c.l.s4 1934713408
        %v1395 = vunpack.c.0.s8 %v1394
        %v1396 = vlaneseq
        %v1397 = vshrl.u32 %v1396, 7
        %v1398 = vsub.s32 %v1395, %v1397
        %v1399 = vrot.slane %v1391, %v1398
        %v1401 = vunpack.c.l.s4 1934713408
        %v1402 = vunpack.c.0.s8 %v1401
        %v1403 = vlaneseq
        %v1404 = vshrl.u32 %v1403, 7
        %v1405 = vsub.s32 %v1402, %v1404
        %v1406 = vrot.slane %v1392, %v1405
        %v1407 = vcombine.low %v1351, %v1383
        %v1408 = vcombine.high %v1351, %v1383
        %v1409 = vcombine.low %v1358, %v1390
        %v1410 = vcombine.high %v1358, %v1390
        %v1411 = vcombine.low %v1367, %v1399
        %v1412 = vcombine.high %v1367, %v1399
        %v1413 = vcombine.low %v1374, %v1406
        %v1414 = vcombine.high %v1374, %v1406
        %1423 = vrot.lane.b32.xlu0 %v1407, 120
        %v1424 = vpop.permute.xlu0 %1423
        %1425 = vrot.lane.b32.xlu0 %v1408, 120
        %v1426 = vpop.permute.xlu0 %1425
        %1427 = vrot.lane.b32.xlu0 %v1409, 120
        %v1428 = vpop.permute.xlu0 %1427
        %1429 = vrot.lane.b32.xlu0 %v1410, 120
        %v1430 = vpop.permute.xlu0 %1429
        %1431 = vrot.lane.b32.xlu0 %v1411, 120
        %v1432 = vpop.permute.xlu0 %1431
        %1433 = vrot.lane.b32.xlu0 %v1412, 120
        %v1434 = vpop.permute.xlu0 %1433
        %1435 = vrot.lane.b32.xlu0 %v1413, 120
        %v1436 = vpop.permute.xlu0 %1435
        %1437 = vrot.lane.b32.xlu0 %v1414, 120
        %v1438 = vpop.permute.xlu0 %1437
        %v1447 = vmax.f32 %v1407, %v1424
        %v1448 = vmax.f32 %v1408, %v1426
        %v1449 = vmax.f32 %v1409, %v1428
        %v1450 = vmax.f32 %v1410, %v1430
        %v1451 = vmax.f32 %v1411, %v1432
        %v1452 = vmax.f32 %v1412, %v1434
        %v1453 = vmax.f32 %v1413, %v1436
        %v1454 = vmax.f32 %v1414, %v1438
        %v1455 = vcombine.low %v1447, %v1449
        %v1456 = vcombine.high %v1447, %v1449
        %v1458 = vunpack.c.l.s4 1983009808
        %v1459 = vunpack.c.0.s8 %v1458
        %v1460 = vlaneseq
        %v1461 = vshrl.u32 %v1460, 7
        %v1462 = vsub.s32 %v1459, %v1461
        %v1463 = vrot.slane %v1455, %v1462
        %v1465 = vunpack.c.l.s4 1983009808
        %v1466 = vunpack.c.0.s8 %v1465
        %v1467 = vlaneseq
        %v1468 = vshrl.u32 %v1467, 7
        %v1469 = vsub.s32 %v1466, %v1468
        %v1470 = vrot.slane %v1456, %v1469
        %v1471 = vcombine.low %v1448, %v1450
        %v1472 = vcombine.high %v1448, %v1450
        %v1474 = vunpack.c.l.s4 1983009808
        %v1475 = vunpack.c.0.s8 %v1474
        %v1476 = vlaneseq
        %v1477 = vshrl.u32 %v1476, 7
        %v1478 = vsub.s32 %v1475, %v1477
        %v1479 = vrot.slane %v1471, %v1478
        %v1481 = vunpack.c.l.s4 1983009808
        %v1482 = vunpack.c.0.s8 %v1481
        %v1483 = vlaneseq
        %v1484 = vshrl.u32 %v1483, 7
        %v1485 = vsub.s32 %v1482, %v1484
        %v1486 = vrot.slane %v1472, %v1485
        %v1487 = vcombine.low %v1451, %v1453
        %v1488 = vcombine.high %v1451, %v1453
        %v1490 = vunpack.c.l.s4 1983009808
        %v1491 = vunpack.c.0.s8 %v1490
        %v1492 = vlaneseq
        %v1493 = vshrl.u32 %v1492, 7
        %v1494 = vsub.s32 %v1491, %v1493
        %v1495 = vrot.slane %v1487, %v1494
        %v1497 = vunpack.c.l.s4 1983009808
        %v1498 = vunpack.c.0.s8 %v1497
        %v1499 = vlaneseq
        %v1500 = vshrl.u32 %v1499, 7
        %v1501 = vsub.s32 %v1498, %v1500
        %v1502 = vrot.slane %v1488, %v1501
        %v1503 = vcombine.low %v1452, %v1454
        %v1504 = vcombine.high %v1452, %v1454
        %v1506 = vunpack.c.l.s4 1983009808
        %v1507 = vunpack.c.0.s8 %v1506
        %v1508 = vlaneseq
        %v1509 = vshrl.u32 %v1508, 7
        %v1510 = vsub.s32 %v1507, %v1509
        %v1511 = vrot.slane %v1503, %v1510
        %v1513 = vunpack.c.l.s4 1983009808
        %v1514 = vunpack.c.0.s8 %v1513
        %v1515 = vlaneseq
        %v1516 = vshrl.u32 %v1515, 7
        %v1517 = vsub.s32 %v1514, %v1516
        %v1518 = vrot.slane %v1504, %v1517
        %v1519 = vcombine.low %v1463, %v1479
        %v1520 = vcombine.high %v1463, %v1479
        %v1522 = vunpack.c.l.s4 1934713408
        %v1523 = vunpack.c.0.s8 %v1522
        %v1524 = vlaneseq
        %v1525 = vshrl.u32 %v1524, 7
        %v1526 = vsub.s32 %v1523, %v1525
        %v1527 = vrot.slane %v1519, %v1526
        %v1529 = vunpack.c.l.s4 1934713408
        %v1530 = vunpack.c.0.s8 %v1529
        %v1531 = vlaneseq
        %v1532 = vshrl.u32 %v1531, 7
        %v1533 = vsub.s32 %v1530, %v1532
        %v1534 = vrot.slane %v1520, %v1533
        %v1535 = vcombine.low %v1470, %v1486
        %v1536 = vcombine.high %v1470, %v1486
        %v1538 = vunpack.c.l.s4 1934713408
        %v1539 = vunpack.c.0.s8 %v1538
        %v1540 = vlaneseq
        %v1541 = vshrl.u32 %v1540, 7
        %v1542 = vsub.s32 %v1539, %v1541
        %v1543 = vrot.slane %v1535, %v1542
        %v1545 = vunpack.c.l.s4 1934713408
        %v1546 = vunpack.c.0.s8 %v1545
        %v1547 = vlaneseq
        %v1548 = vshrl.u32 %v1547, 7
        %v1549 = vsub.s32 %v1546, %v1548
        %v1550 = vrot.slane %v1536, %v1549
        %v1551 = vcombine.low %v1495, %v1511
        %v1552 = vcombine.high %v1495, %v1511
        %v1554 = vunpack.c.l.s4 1934713408
        %v1555 = vunpack.c.0.s8 %v1554
        %v1556 = vlaneseq
        %v1557 = vshrl.u32 %v1556, 7
        %v1558 = vsub.s32 %v1555, %v1557
        %v1559 = vrot.slane %v1551, %v1558
        %v1561 = vunpack.c.l.s4 1934713408
        %v1562 = vunpack.c.0.s8 %v1561
        %v1563 = vlaneseq
        %v1564 = vshrl.u32 %v1563, 7
        %v1565 = vsub.s32 %v1562, %v1564
        %v1566 = vrot.slane %v1552, %v1565
        %v1567 = vcombine.low %v1502, %v1518
        %v1568 = vcombine.high %v1502, %v1518
        %v1570 = vunpack.c.l.s4 1934713408
        %v1571 = vunpack.c.0.s8 %v1570
        %v1572 = vlaneseq
        %v1573 = vshrl.u32 %v1572, 7
        %v1574 = vsub.s32 %v1571, %v1573
        %v1575 = vrot.slane %v1567, %v1574
        %v1577 = vunpack.c.l.s4 1934713408
        %v1578 = vunpack.c.0.s8 %v1577
        %v1579 = vlaneseq
        %v1580 = vshrl.u32 %v1579, 7
        %v1581 = vsub.s32 %v1578, %v1580
        %v1582 = vrot.slane %v1568, %v1581
        %v1583 = vcombine.low %v1527, %v1559
        %v1584 = vcombine.high %v1527, %v1559
        %v1585 = vcombine.low %v1534, %v1566
        %v1586 = vcombine.high %v1534, %v1566
        %v1587 = vcombine.low %v1543, %v1575
        %v1588 = vcombine.high %v1543, %v1575
        %v1589 = vcombine.low %v1550, %v1582
        %v1590 = vcombine.high %v1550, %v1582
        %1592 = vrot.lane.b32.xlu0 %v1584, 8
        %v1593 = vpop.permute.xlu0 %1592
        %1596 = vrot.lane.b32.xlu0 %v1585, 16
        %v1597 = vpop.permute.xlu0 %1596
        %1600 = vrot.lane.b32.xlu0 %v1586, 24
        %v1601 = vpop.permute.xlu0 %1600
        %1604 = vrot.lane.b32.xlu0 %v1587, 32
        %v1605 = vpop.permute.xlu0 %1604
        %1608 = vrot.lane.b32.xlu0 %v1588, 40
        %v1609 = vpop.permute.xlu0 %1608
        %1612 = vrot.lane.b32.xlu0 %v1589, 48
        %v1613 = vpop.permute.xlu0 %1612
        %1616 = vrot.lane.b32.xlu0 %v1590, 56
        %v1617 = vpop.permute.xlu0 %1616
        %vm1619 = vcmask 64512
        %v1620 = vsel %vm1619, %v1583, %v1593
        %vm1621 = vcmask 130048
        %v1622 = vsel %vm1621, %v1620, %v1597
        %vm1623 = vcmask 195584
        %v1624 = vsel %vm1623, %v1622, %v1601
        %vm1625 = vcmask 261120
        %v1626 = vsel %vm1625, %v1624, %v1605
        %vm1627 = vcmask 326656
        %v1628 = vsel %vm1627, %v1626, %v1609
        %vm1629 = vcmask 392192
        %v1630 = vsel %vm1629, %v1628, %v1613
        %vm1631 = vcmask 457728
        %v1632 = vsel %vm1631, %v1630, %v1617
        %1633 = vst.msk [vmem:[%s285] sm:$0xff] %vm339, %v1632
        %s1634 = sand.u32 %s144, 1
        %s1635 = scalar_lea.sflag [#allocation4], %s1634
        %s1636 = sand.u32 %s144, 1
        %s1637 = smul.addr %s1636, 16
        %s1638 = scalar_lea.vmem [#allocation7], %s1637
        %s1639 = sand.u32 %s170, 1
        %s1640 = scalar_lea.sflag [#allocation9], %s1639
        %s1641 = sand.u32 %s170, 1
        %s1642 = smul.addr %s1641, 8
        %s1643 = scalar_lea.vmem [#allocation8], %s1642
        // Predicated region
        $region49: #{tpu_custom_call.1} parent=39 // pred_check
          %p1644 = pneg %p154
        $region50: #{tpu_custom_call.1} parent=39 // pred_check_branch
          %1646 = sbr.rel (%p1644) target = $region52
        $region51: #{tpu_custom_call.1} parent=39 // pred_region
          %s1648 = ssub.s32 256, 256
          %1649 = vsyncadd %s1635, %s1648
          %s1650 = smul.addr %s26, 2
          %s1651 = smul.addr %s1650, 128
          %s1652 = scalar_lea.hbm %s5, %s1651
          %s1653 = sshll.u32 %s1638, 4
          %s1654 = int_to_ptr.vmem [resolvable:$true] %s1653
          %1659 = dma.vmem_to_hbm [thread:$0]  %s1654, 256, %s1652, %s1635, 128, 128, 8
        $region52: #{tpu_custom_call.1} parent=39 // pred_fallthru
          _
        // Predicated region
        $region53: #{tpu_custom_call.1} parent=39 // pred_check
          %p1660 = pneg %p180
        $region54: #{tpu_custom_call.1} parent=39 // pred_check_branch
          %1662 = sbr.rel (%p1660) target = $region56
        $region55: #{tpu_custom_call.1} parent=39 // pred_region
          %s1664 = ssub.s32 128, 128
          %1665 = vsyncadd %s1640, %s1664
          %s1666 = smul.addr %s26, 128
          %s1667 = scalar_lea.hbm %s6, %s1666
          %s1669 = sshll.u32 %s1643, 4
          %s1670 = int_to_ptr.vmem [resolvable:$true] %s1669
          %1672 = dma.vmem_to_hbm [thread:$0]  %s1670, 128, %s1667, %s1640
        $region56: #{tpu_custom_call.1} parent=39 // pred_fallthru
          _
      $region40: #{tpu_custom_call.1} parent=5 // pred_fallthru
        _
      %p1673 = scmp.le.s32.totalorder 2, %s21
      // Predicated region
      $region57: #{tpu_custom_call.1} parent=5 // pred_check
        %p1674 = pneg %p1673
      $region58: #{tpu_custom_call.1} parent=5 // pred_check_branch
        %1676 = sbr.rel (%p1674) target = $region60
      $region59: #{tpu_custom_call.1} parent=5 // pred_region
        %s1677 = ssub.s32 %s21, 2
        // Predicated region
        $region61: #{tpu_custom_call.1} parent=59 // pred_check
          %p1678 = pneg %p160
        $region62: #{tpu_custom_call.1} parent=59 // pred_check_branch
          %1680 = sbr.rel (%p1678) target = $region64
        $region63: #{tpu_custom_call.1} parent=59 // pred_region
          %s1681 = sand.u32 %s145, 1
          %s1682 = scalar_lea.sflag [#allocation4], %s1681
          %s1683 = sand.u32 %s145, 1
          %s1684 = smul.addr %s1683, 16
          %s1685 = scalar_lea.vmem [#allocation7], %s1684
          %1686 = dma.done %s1682, 256
        $region64: #{tpu_custom_call.1} parent=59 // pred_fallthru
          _
        // Predicated region
        $region65: #{tpu_custom_call.1} parent=59 // pred_check
          %p1687 = pneg %p186
        $region66: #{tpu_custom_call.1} parent=59 // pred_check_branch
          %1689 = sbr.rel (%p1687) target = $region68
        $region67: #{tpu_custom_call.1} parent=59 // pred_region
          %s1690 = sand.u32 %s171, 1
          %s1691 = scalar_lea.sflag [#allocation9], %s1690
          %s1692 = sand.u32 %s171, 1
          %s1693 = smul.addr %s1692, 8
          %s1694 = scalar_lea.vmem [#allocation8], %s1693
          %1695 = dma.done %s1691, 128
        $region68: #{tpu_custom_call.1} parent=59 // pred_fallthru
          _
      $region60: #{tpu_custom_call.1} parent=5 // pred_fallthru
        _
    $region6: #{tpu_custom_call.1} parent=1 // loop_footer
      %s25 = sadd.s32 1, %s21
    $region7: #{tpu_custom_call.1} parent=1 // loop_footer_branch
      %20 = sbr.rel target = $region3
    $region8: #{tpu_custom_call.1} parent=1 // loop_exit
      _
    %1696 = vsyncpa [#allocation3], 1
    %s1697 = scalar_lea.sflag [#allocation3], 1
    %1698 = vsyncpa %s1697, 1
    %1699 = vsyncpa [#allocation6], 1
    %1700 = vsyncpa [#allocation4], 1
    %s1701 = scalar_lea.sflag [#allocation4], 1
    %1702 = vsyncpa %s1701, 1
    %1703 = vsyncpa [#allocation9], 1
    %s1704 = scalar_lea.sflag [#allocation9], 1
    %1705 = vsyncpa %s1704, 1

</llo_original>
